<compile_context>
chip_gen: v7x
topology: tpu7x:2x2x1
jax: 0.10.0
libtpu: 0.0.40
codegen_flags: <defaults>
</compile_context>

<pallas_src>
import jax
import jax.numpy as jnp
from jax.experimental import pallas as pl
from jax.experimental.pallas import tpu as pltpu


# ----------------------------- Pallas kernel ------------------------------ #

def diffusion_kernel(c1_ref, sv_ref,                       # SMEM scalar prefetch, (T,)
                     xT_ref, noise_ref, condp_ref, temb_ref,
                     w1_ref, w2s_ref, b2s_ref,
                     out_ref):
    """One grid iteration = TS consecutive (reversed) diffusion steps on one pixel tile.

    grid = (pixel_tile j [parallel], time_chunk i [arbitrary, sequential]).
    Chunk i covers reversed steps [i*TS, (i+1)*TS); reversed step s corresponds to
    time_step = T-1-s (all per-step tables are pre-reversed in the wrapper).
    x_t is carried directly in out_ref (resident output block == accumulator).
    """
    chunk = pl.program_id(1)
    TS = noise_ref.shape[0]
    last_step = TS * pl.num_programs(1) - 1         # reversed index of time_step 0

    @pl.when(chunk == 0)
    def _():
        out_ref[...] = xT_ref[...]

    # Time-invariant operands, hoisted out of the unrolled step loop.
    condp = condp_ref[...].astype(jnp.float32)       # (Hd, TN), streamed bf16
    w1 = w1_ref[...]                                 # (Hd, C)

    x = out_ref[...]                                 # (C, TN) f32, current x_t

    # Statically unrolled chunk of TS steps (TS is small & static; live state is a
    # few vregs, so this is equivalent to lax.fori_loop(..., unroll=True) and gives
    # static ref indices).
    for ts in range(TS):
        step = chunk * TS + ts                       # global reversed step index

        # --- model(cat(x_t, cond), t): per-pixel MLP (1x1 convs) + time emb ---
        h = jnp.dot(w1, x, preferred_element_type=jnp.float32)       # (Hd, TN)
        h = jnp.maximum(h + condp + temb_ref[ts], 0.0)
        # w2s/b2s are pre-scaled by -coeff2[step]: this dot yields -coeff2*eps.
        neg_c2_eps = (jnp.dot(w2s_ref[ts], h, preferred_element_type=jnp.float32)
                      + b2s_ref[ts])                                  # (C, TN)

        # --- p_mean_variance + ancestral sampling update ---
        c1 = c1_ref[step]                            # sqrt(1/alpha_t)
        # time_step == 0 (reversed index == last_step) draws no noise.
        sv = jnp.where(step == last_step, 0.0, sv_ref[step])          # sqrt(var_t)
        x = c1 * x + neg_c2_eps + sv * noise_ref[ts]

    out_ref[...] = x

    # TODO(synk): replace the streamed (T, C, N) noise with in-kernel
    # pltpu.prng_seed + pltpu.stateful_normal (seeded per (j, step)) to remove the
    # only O(T*N) HBM stream; this changes the RNG stream vs. the reference, so the
    # correctness check would become statistical.


def _pick_tile_n(N, max_tile=2048, min_tiles=2):
    """Largest lane-aligned tile <= max_tile dividing N, preferring layouts that
    leave >= min_tiles pixel tiles (feeds both TensorCores on v7x)."""
    for align in (256, 128):          # v6e/v7x MXU lane push = 256 lanes; v5e = 128
        cands = [t for t in range(align, min(N, max_tile) + 1, align) if N % t == 0]
        if cands:
            multi = [t for t in cands if N // t >= min_tiles]
            return max(multi) if multi else max(cands)
    return N


def _pick_time_chunk(T, max_ts=16):
    """Largest divisor of T that is <= max_ts (diffusion steps fused per grid iter)."""
    ts = 1
    for cand in range(2, min(T, max_ts) + 1):
        if T % cand == 0:
            ts = cand
    return ts


def run_reverse_diffusion(xT_T, noise_rev_T, condp_T, temb_rev,
                          w1T, w2s_rev, b2s_rev,
                          coeff1_rev, sqrtvar_rev, *, tile_n=None, time_chunk=None):
    T = int(coeff1_rev.shape[0])
    C, N = xT_T.shape
    Hd = w1T.shape[0]

    if tile_n is None:
        tile_n = _pick_tile_n(N)
    if time_chunk is None:
        time_chunk = _pick_time_chunk(T)
    TS = time_chunk
    assert N % tile_n == 0, (N, tile_n)
    assert T % TS == 0, (T, TS)

    grid_spec = pltpu.PrefetchScalarGridSpec(
        num_scalar_prefetch=2,
        grid=(N // tile_n, T // TS),
        in_specs=[
            pl.BlockSpec((C, tile_n), lambda j, i, *_: (0, j)),          # x_T        (C, N)     f32
            pl.BlockSpec((TS, C, tile_n), lambda j, i, *_: (i, 0, j)),   # noise      (T, C, N)  f32, per chunk
            pl.BlockSpec((Hd, tile_n), lambda j, i, *_: (0, j)),         # cond proj  (Hd, N)    bf16, hoisted
            pl.BlockSpec((TS, Hd, 1), lambda j, i, *_: (i, 0, 0)),       # temb + b1  (T, Hd, 1) per chunk
            pl.BlockSpec((Hd, C), lambda j, i, *_: (0, 0)),              # W1^T (x_t part of the denoiser)
            pl.BlockSpec((TS, C, Hd), lambda j, i, *_: (i, 0, 0)),       # -coeff2[t] * W2^T
            pl.BlockSpec((TS, C, 1), lambda j, i, *_: (i, 0, 0)),        # -coeff2[t] * b2^T
        ],
        out_specs=pl.BlockSpec((C, tile_n), lambda j, i, *_: (0, j)),
    )
    # NOTE: constant-index blocks (W1) would happily live with pipeline_mode=
    # pl.Buffered(1); at these block sizes the VMEM saving is negligible, so the
    # default double-buffering is kept for robustness.

    # Explicit VMEM budget: double-buffered inputs + resident output block.
    per_buf = (C * tile_n * 4 + TS * C * tile_n * 4 + Hd * tile_n * 2
               + TS * Hd * 4 + Hd * C * 4 + TS * C * Hd * 4 + TS * C * 4)
    budget = 2 * per_buf + C * tile_n * 4
    vmem_limit = int(min(48 * 2**20, max(32 * 2**20, 4 * budget)))

    return pl.pallas_call(
        diffusion_kernel,
        out_shape=jax.ShapeDtypeStruct((C, N), jnp.float32),
        grid_spec=grid_spec,
        compiler_params=pltpu.CompilerParams(
            dimension_semantics=("parallel", "arbitrary"),
            vmem_limit_bytes=vmem_limit),
    )(coeff1_rev, sqrtvar_rev,
      xT_T, noise_rev_T, condp_T, temb_rev, w1T, w2s_rev, b2s_rev)


# ------------------------------ JAX glue ---------------------------------- #

def nchw_to_rows(x):
    b, c, h, w = x.shape
    return jnp.transpose(x, (0, 2, 3, 1)).reshape(b * h * w, c)


def rows_to_nchw(x, b, c, h, w):
    return jnp.transpose(x.reshape(b, h, w, c), (0, 3, 1, 2))


def make_schedule(T):
    """Linear beta schedule + the buffers registered in GaussianDiffusion.__init__."""
    betas = jnp.linspace(1e-4, 2e-2, T, dtype=jnp.float32)
    alphas = 1.0 - betas
    alphas_bar = jnp.cumprod(alphas)
    alphas_bar_prev = jnp.concatenate([jnp.ones((1,), jnp.float32), alphas_bar[:-1]])
    coeff1 = jnp.sqrt(1.0 / alphas)
    coeff2 = coeff1 * (1.0 - alphas) / jnp.sqrt(1.0 - alphas_bar)
    posterior_var = betas * (1.0 - alphas_bar_prev) / (1.0 - alphas_bar)
    var = jnp.concatenate([posterior_var[1:2], betas[1:]])   # as in p_mean_variance
    sqrt_var = jnp.sqrt(var)
    return coeff1, coeff2, sqrt_var


def reference_reverse_diffusion(x_T_rows, cond_proj_rows, noise_by_t, temb_by_t,
                                w1x, b1, w2, b2, coeff1, coeff2, sqrt_var, T):
    """Pure-JAX mirror of GaussianDiffusion.forward (pre_ori='False').

    The time-invariant conditioning projection is passed pre-computed (the same
    values the kernel consumes) so the correctness check stays tight."""
    x = x_T_rows
    for time_step in reversed(range(T)):
        h = jnp.dot(x, w1x, preferred_element_type=jnp.float32) + cond_proj_rows
        h = jnp.maximum(h + temb_by_t[time_step][None, :] + b1, 0.0)
        eps = jnp.dot(h, w2, preferred_element_type=jnp.float32) + b2
        mean = coeff1[time_step] * x - coeff2[time_step] * eps
        noise = noise_by_t[time_step] if time_step > 0 else 0.0
        x = mean + sqrt_var[time_step] * noise
    return x


if __name__ == "__main__":
    # Small shapes consistent with the module's forward:
    B, C, H, W = 2, 4, 16, 16          # x_T: (B, C, H, W)  (NCHW)
    Cc = 4                             # channels of each of cond / cond_J / cond_hist
    T = 8                              # diffusion steps
    Hd = 32                            # hidden width of synthetic denoiser

    N = B * H * W
    Ccond = 3 * Cc

    key = jax.random.PRNGKey(0)
    ks = jax.random.split(key, 10)
    x_T = jax.random.normal(ks[0], (B, C, H, W), jnp.float32)
    cond = jax.random.normal(ks[1], (B, Cc, H, W), jnp.float32)
    cond_J = jax.random.normal(ks[2], (B, Cc, H, W), jnp.float32)
    cond_hist = jax.random.normal(ks[3], (B, Cc, H, W), jnp.float32)

    # Ancestral-sampling noise per time_step; time_step 0 uses no noise — gated
    # in-kernel, so the table need not be zeroed.  Streamed f32 so the sampler's
    # numerics match the reference exactly.
    noise_by_t = jax.random.normal(ks[4], (T, N, C), jnp.float32)

    # deterministic synthetic denoiser parameters (per-pixel MLP == 1x1 convs)
    w1x = 0.2 * jax.random.normal(ks[5], (C, Hd), jnp.float32)
    w1c = 0.2 * jax.random.normal(ks[6], (Ccond, Hd), jnp.float32)
    b1 = 0.05 * jax.random.normal(ks[7], (1, Hd), jnp.float32)
    w2 = 0.2 * jax.random.normal(ks[8], (Hd, C), jnp.float32)
    b2 = 0.05 * jax.random.normal(ks[9], (1, C), jnp.float32)
    temb_by_t = 0.1 * jnp.sin(
        jnp.arange(T, dtype=jnp.float32)[:, None]
        * (jnp.arange(Hd, dtype=jnp.float32)[None, :] + 1.0) / Hd)

    coeff1, coeff2, sqrt_var = make_schedule(T)

    # flatten NCHW -> rows (N, C)
    x_T_rows = nchw_to_rows(x_T)
    cond_rows = jnp.concatenate(
        [nchw_to_rows(cond), nchw_to_rows(cond_J), nchw_to_rows(cond_hist)], axis=-1)

    # Time-invariant conditioning projection, hoisted out of the T loop.
    # Streamed to the kernel as bf16; the reference consumes the same dequantized
    # values so the check stays tight (precision impact is negligible pre-ReLU).
    cond_proj = jnp.dot(cond_rows, w1c, preferred_element_type=jnp.float32)   # (N, Hd) f32
    cond_proj_bf16_T = cond_proj.T.astype(jnp.bfloat16)                       # (Hd, N) bf16
    cond_proj_ref = cond_proj_bf16_T.astype(jnp.float32).T                    # (N, Hd) f32

    # reverse the per-step tables so reversed step s == time_step T-1-s
    rev = jnp.arange(T - 1, -1, -1)
    coeff1_rev = coeff1[rev]
    coeff2_rev = coeff2[rev]
    sqrtvar_rev = sqrt_var[rev]

    # ---- lane-dense (channels-on-sublane, pixels-on-lane) kernel layout ----
    xT_T = x_T_rows.T                                         # (C, N)     f32
    noise_rev_T = jnp.transpose(noise_by_t, (0, 2, 1))[rev]   # (T, C, N)  f32
    temb_rev = (temb_by_t + b1)[rev][..., None]               # (T, Hd, 1) f32 (b1 folded in)
    w1T = w1x.T                                               # (Hd, C)
    w2s_rev = (-coeff2_rev)[:, None, None] * w2.T[None]       # (T, C, Hd)  -coeff2[t]*W2^T
    b2s_rev = (-coeff2_rev)[:, None, None] * b2.T[None]       # (T, C, 1)   -coeff2[t]*b2^T

    x0_T = run_reverse_diffusion(
        xT_T, noise_rev_T, cond_proj_bf16_T, temb_rev,
        w1T, w2s_rev, b2s_rev, coeff1_rev, sqrtvar_rev)
    x0_T = jax.block_until_ready(x0_T)
    x0_rows = x0_T.T                                          # (N, C)

    # pure-JAX reference check (mirrors the PyTorch module loop exactly)
    x0_ref = reference_reverse_diffusion(
        x_T_rows, cond_proj_ref, noise_by_t, temb_by_t,
        w1x, b1, w2, b2, coeff1, coeff2, sqrt_var, T)

    assert not bool(jnp.any(jnp.isnan(x0_rows))), "nan in tensor."
    assert bool(jnp.allclose(x0_rows, x0_ref, rtol=1e-2, atol=1e-2)), "kernel/ref mismatch"

    # back to NCHW, matching the PyTorch output layout
    x_0 = rows_to_nchw(x0_rows, B, C, H, W)
    jax.block_until_ready(x_0)
    assert x_0.shape == (B, C, H, W)

    print("KERNEL_OK")
</pallas_src>

<mosaic_0001>
module attributes {stable_mosaic.version = 11 : i64} {
  func.func @diffusion_kernel(%arg0: i32, %arg1: i32, %arg2: memref<8xf32, #tpu.memory_space<smem>>, %arg3: memref<8xf32, #tpu.memory_space<smem>>, %arg4: memref<4x256xf32, #tpu.memory_space<vmem>>, %arg5: memref<8x4x256xf32, #tpu.memory_space<vmem>>, %arg6: memref<32x256xbf16, #tpu.memory_space<vmem>>, %arg7: memref<8x32x1xf32, #tpu.memory_space<vmem>>, %arg8: memref<32x4xf32, #tpu.memory_space<vmem>>, %arg9: memref<8x4x32xf32, #tpu.memory_space<vmem>>, %arg10: memref<8x4x1xf32, #tpu.memory_space<vmem>>, %arg11: memref<4x256xf32, #tpu.memory_space<vmem>>) attributes {dimension_semantics = [#tpu.dimension_semantics<parallel>, #tpu.dimension_semantics<arbitrary>], iteration_bounds = array<i64: 2, 1>, scalar_prefetch = 2 : i64, scratch_operands = 0 : i64, tpu.core_type = #tpu.core_type<tc>, window_params = [{transform_indices = @transform_0, window_bounds = array<i64: 4, 256>}, {transform_indices = @transform_1, window_bounds = array<i64: 8, 4, 256>}, {transform_indices = @transform_2, window_bounds = array<i64: 32, 256>}, {transform_indices = @transform_3, window_bounds = array<i64: 8, 32, 1>}, {pipeline_mode = #tpu.pipeline_mode<synchronous>, transform_indices = @transform_4, window_bounds = array<i64: 32, 4>}, {transform_indices = @transform_5, window_bounds = array<i64: 8, 4, 32>}, {transform_indices = @transform_6, window_bounds = array<i64: 8, 4, 1>}, {transform_indices = @transform_7, window_bounds = array<i64: 4, 256>}]} {
    %c0_i32 = arith.constant 0 : i32
    %0 = arith.cmpi eq, %arg1, %c0_i32 : i32
    %1 = arith.extui %0 : i1 to i32
    %c0_i32_0 = arith.constant 0 : i32
    %2 = arith.cmpi ne, %1, %c0_i32_0 : i32
    scf.if %2 {
      %c0_144 = arith.constant 0 : index
      %c0_145 = arith.constant 0 : index
      %256 = vector.load %arg4[%c0_144, %c0_145] : memref<4x256xf32, #tpu.memory_space<vmem>>, vector<4x256xf32>
      %c0_146 = arith.constant 0 : index
      %c0_147 = arith.constant 0 : index
      %257 = vector.load %arg11[%c0_146, %c0_147] : memref<4x256xf32, #tpu.memory_space<vmem>>, vector<4x256xf32>
      tpu.vector_store %arg11[%c0_146, %c0_147], %256 {strides = array<i32>} : memref<4x256xf32, #tpu.memory_space<vmem>>, vector<4x256xf32>,
    } else {
    }
    %c0 = arith.constant 0 : index
    %c0_1 = arith.constant 0 : index
    %3 = vector.load %arg6[%c0, %c0_1] : memref<32x256xbf16, #tpu.memory_space<vmem>>, vector<32x256xbf16>
    %4 = arith.extf %3 : vector<32x256xbf16> to vector<32x256xf32>
    %c0_2 = arith.constant 0 : index
    %c0_3 = arith.constant 0 : index
    %5 = vector.load %arg8[%c0_2, %c0_3] : memref<32x4xf32, #tpu.memory_space<vmem>>, vector<32x4xf32>
    %c0_4 = arith.constant 0 : index
    %c0_5 = arith.constant 0 : index
    %6 = vector.load %arg11[%c0_4, %c0_5] : memref<4x256xf32, #tpu.memory_space<vmem>>, vector<4x256xf32>
    %c8_i32 = arith.constant 8 : i32
    %7 = arith.muli %arg1, %c8_i32 : i32
    %c0_i32_6 = arith.constant 0 : i32
    %8 = arith.addi %7, %c0_i32_6 : i32
    %cst = arith.constant dense<0.000000e+00> : vector<32x256xf32>
    %9 = tpu.matmul %5, %6, %cst {dimension_numbers = #tpu.dot_dimension_numbers<[1], [0], [0], [1], [0, 0, 1, 1], [], []>} : vector<32x4xf32>, vector<4x256xf32>, vector<32x256xf32> -> vector<32x256xf32>
    %10 = arith.addf %9, %4 : vector<32x256xf32>
    %c0_7 = arith.constant 0 : index
    %c0_8 = arith.constant 0 : index
    %c0_9 = arith.constant 0 : index
    %11 = vector.load %arg7[%c0_7, %c0_8, %c0_9] : memref<8x32x1xf32, #tpu.memory_space<vmem>>, vector<1x32x1xf32>
    %12 = vector.shape_cast %11 : vector<1x32x1xf32> to vector<32x1xf32>
    %13 = vector.broadcast %12 : vector<32x1xf32> to vector<32x256xf32>
    %14 = arith.addf %10, %13 : vector<32x256xf32>
    %cst_10 = arith.constant 0.000000e+00 : f32
    %15 = vector.broadcast %cst_10 : f32 to vector<32x256xf32>
    %16 = arith.maximumf %14, %15 : vector<32x256xf32>
    %c0_11 = arith.constant 0 : index
    %c0_12 = arith.constant 0 : index
    %c0_13 = arith.constant 0 : index
    %17 = vector.load %arg9[%c0_11, %c0_12, %c0_13] : memref<8x4x32xf32, #tpu.memory_space<vmem>>, vector<1x4x32xf32>
    %18 = vector.shape_cast %17 : vector<1x4x32xf32> to vector<4x32xf32>
    %cst_14 = arith.constant dense<0.000000e+00> : vector<4x256xf32>
    %19 = tpu.matmul %18, %16, %cst_14 {dimension_numbers = #tpu.dot_dimension_numbers<[1], [0], [0], [1], [0, 0, 1, 1], [], []>} : vector<4x32xf32>, vector<32x256xf32>, vector<4x256xf32> -> vector<4x256xf32>
    %c0_15 = arith.constant 0 : index
    %c0_16 = arith.constant 0 : index
    %c0_17 = arith.constant 0 : index
    %20 = vector.load %arg10[%c0_15, %c0_16, %c0_17] : memref<8x4x1xf32, #tpu.memory_space<vmem>>, vector<1x4x1xf32>
    %21 = vector.shape_cast %20 : vector<1x4x1xf32> to vector<4x1xf32>
    %22 = vector.broadcast %21 : vector<4x1xf32> to vector<4x256xf32>
    %23 = arith.addf %19, %22 : vector<4x256xf32>
    %24 = arith.index_cast %8 : i32 to index
    %25 = memref.load %arg2[%24] : memref<8xf32, #tpu.memory_space<smem>>
    %c7_i32 = arith.constant 7 : i32
    %26 = arith.cmpi eq, %8, %c7_i32 : i32
    %27 = arith.index_cast %8 : i32 to index
    %28 = memref.load %arg3[%27] : memref<8xf32, #tpu.memory_space<smem>>
    %cst_18 = arith.constant 0.000000e+00 : f32
    %29 = arith.select %26, %cst_18, %28 : f32
    %30 = vector.broadcast %25 : f32 to vector<4x256xf32>
    %31 = arith.mulf %30, %6 : vector<4x256xf32>
    %32 = arith.addf %31, %23 : vector<4x256xf32>
    %c0_19 = arith.constant 0 : index
    %c0_20 = arith.constant 0 : index
    %c0_21 = arith.constant 0 : index
    %33 = vector.load %arg5[%c0_19, %c0_20, %c0_21] : memref<8x4x256xf32, #tpu.memory_space<vmem>>, vector<1x4x256xf32>
    %34 = vector.shape_cast %33 : vector<1x4x256xf32> to vector<4x256xf32>
    %35 = vector.broadcast %29 : f32 to vector<4x256xf32>
    %36 = arith.mulf %35, %34 : vector<4x256xf32>
    %37 = arith.addf %32, %36 : vector<4x256xf32>
    %c8_i32_22 = arith.constant 8 : i32
    %38 = arith.muli %arg1, %c8_i32_22 : i32
    %c1_i32 = arith.constant 1 : i32
    %39 = arith.addi %38, %c1_i32 : i32
    %cst_23 = arith.constant dense<0.000000e+00> : vector<32x256xf32>
    %40 = tpu.matmul %5, %37, %cst_23 {dimension_numbers = #tpu.dot_dimension_numbers<[1], [0], [0], [1], [0, 0, 1, 1], [], []>} : vector<32x4xf32>, vector<4x256xf32>, vector<32x256xf32> -> vector<32x256xf32>
    %41 = arith.addf %40, %4 : vector<32x256xf32>
    %c1 = arith.constant 1 : index
    %c0_24 = arith.constant 0 : index
    %c0_25 = arith.constant 0 : index
    %42 = vector.load %arg7[%c1, %c0_24, %c0_25] : memref<8x32x1xf32, #tpu.memory_space<vmem>>, vector<1x32x1xf32>
    %43 = vector.shape_cast %42 : vector<1x32x1xf32> to vector<32x1xf32>
    %44 = vector.broadcast %43 : vector<32x1xf32> to vector<32x256xf32>
    %45 = arith.addf %41, %44 : vector<32x256xf32>
    %cst_26 = arith.constant 0.000000e+00 : f32
    %46 = vector.broadcast %cst_26 : f32 to vector<32x256xf32>
    %47 = arith.maximumf %45, %46 : vector<32x256xf32>
    %c1_27 = arith.constant 1 : index
    %c0_28 = arith.constant 0 : index
    %c0_29 = arith.constant 0 : index
    %48 = vector.load %arg9[%c1_27, %c0_28, %c0_29] : memref<8x4x32xf32, #tpu.memory_space<vmem>>, vector<1x4x32xf32>
    %49 = vector.shape_cast %48 : vector<1x4x32xf32> to vector<4x32xf32>
    %cst_30 = arith.constant dense<0.000000e+00> : vector<4x256xf32>
    %50 = tpu.matmul %49, %47, %cst_30 {dimension_numbers = #tpu.dot_dimension_numbers<[1], [0], [0], [1], [0, 0, 1, 1], [], []>} : vector<4x32xf32>, vector<32x256xf32>, vector<4x256xf32> -> vector<4x256xf32>
    %c1_31 = arith.constant 1 : index
    %c0_32 = arith.constant 0 : index
    %c0_33 = arith.constant 0 : index
    %51 = vector.load %arg10[%c1_31, %c0_32, %c0_33] : memref<8x4x1xf32, #tpu.memory_space<vmem>>, vector<1x4x1xf32>
    %52 = vector.shape_cast %51 : vector<1x4x1xf32> to vector<4x1xf32>
    %53 = vector.broadcast %52 : vector<4x1xf32> to vector<4x256xf32>
    %54 = arith.addf %50, %53 : vector<4x256xf32>
    %55 = arith.index_cast %39 : i32 to index
    %56 = memref.load %arg2[%55] : memref<8xf32, #tpu.memory_space<smem>>
    %c7_i32_34 = arith.constant 7 : i32
    %57 = arith.cmpi eq, %39, %c7_i32_34 : i32
    %58 = arith.index_cast %39 : i32 to index
    %59 = memref.load %arg3[%58] : memref<8xf32, #tpu.memory_space<smem>>
    %cst_35 = arith.constant 0.000000e+00 : f32
    %60 = arith.select %57, %cst_35, %59 : f32
    %61 = vector.broadcast %56 : f32 to vector<4x256xf32>
    %62 = arith.mulf %61, %37 : vector<4x256xf32>
    %63 = arith.addf %62, %54 : vector<4x256xf32>
    %c1_36 = arith.constant 1 : index
    %c0_37 = arith.constant 0 : index
    %c0_38 = arith.constant 0 : index
    %64 = vector.load %arg5[%c1_36, %c0_37, %c0_38] : memref<8x4x256xf32, #tpu.memory_space<vmem>>, vector<1x4x256xf32>
    %65 = vector.shape_cast %64 : vector<1x4x256xf32> to vector<4x256xf32>
    %66 = vector.broadcast %60 : f32 to vector<4x256xf32>
    %67 = arith.mulf %66, %65 : vector<4x256xf32>
    %68 = arith.addf %63, %67 : vector<4x256xf32>
    %c8_i32_39 = arith.constant 8 : i32
    %69 = arith.muli %arg1, %c8_i32_39 : i32
    %c2_i32 = arith.constant 2 : i32
    %70 = arith.addi %69, %c2_i32 : i32
    %cst_40 = arith.constant dense<0.000000e+00> : vector<32x256xf32>
    %71 = tpu.matmul %5, %68, %cst_40 {dimension_numbers = #tpu.dot_dimension_numbers<[1], [0], [0], [1], [0, 0, 1, 1], [], []>} : vector<32x4xf32>, vector<4x256xf32>, vector<32x256xf32> -> vector<32x256xf32>
    %72 = arith.addf %71, %4 : vector<32x256xf32>
    %c2 = arith.constant 2 : index
    %c0_41 = arith.constant 0 : index
    %c0_42 = arith.constant 0 : index
    %73 = vector.load %arg7[%c2, %c0_41, %c0_42] : memref<8x32x1xf32, #tpu.memory_space<vmem>>, vector<1x32x1xf32>
    %74 = vector.shape_cast %73 : vector<1x32x1xf32> to vector<32x1xf32>
    %75 = vector.broadcast %74 : vector<32x1xf32> to vector<32x256xf32>
    %76 = arith.addf %72, %75 : vector<32x256xf32>
    %cst_43 = arith.constant 0.000000e+00 : f32
    %77 = vector.broadcast %cst_43 : f32 to vector<32x256xf32>
    %78 = arith.maximumf %76, %77 : vector<32x256xf32>
    %c2_44 = arith.constant 2 : index
    %c0_45 = arith.constant 0 : index
    %c0_46 = arith.constant 0 : index
    %79 = vector.load %arg9[%c2_44, %c0_45, %c0_46] : memref<8x4x32xf32, #tpu.memory_space<vmem>>, vector<1x4x32xf32>
    %80 = vector.shape_cast %79 : vector<1x4x32xf32> to vector<4x32xf32>
    %cst_47 = arith.constant dense<0.000000e+00> : vector<4x256xf32>
    %81 = tpu.matmul %80, %78, %cst_47 {dimension_numbers = #tpu.dot_dimension_numbers<[1], [0], [0], [1], [0, 0, 1, 1], [], []>} : vector<4x32xf32>, vector<32x256xf32>, vector<4x256xf32> -> vector<4x256xf32>
    %c2_48 = arith.constant 2 : index
    %c0_49 = arith.constant 0 : index
    %c0_50 = arith.constant 0 : index
    %82 = vector.load %arg10[%c2_48, %c0_49, %c0_50] : memref<8x4x1xf32, #tpu.memory_space<vmem>>, vector<1x4x1xf32>
    %83 = vector.shape_cast %82 : vector<1x4x1xf32> to vector<4x1xf32>
    %84 = vector.broadcast %83 : vector<4x1xf32> to vector<4x256xf32>
    %85 = arith.addf %81, %84 : vector<4x256xf32>
    %86 = arith.index_cast %70 : i32 to index
    %87 = memref.load %arg2[%86] : memref<8xf32, #tpu.memory_space<smem>>
    %c7_i32_51 = arith.constant 7 : i32
    %88 = arith.cmpi eq, %70, %c7_i32_51 : i32
    %89 = arith.index_cast %70 : i32 to index
    %90 = memref.load %arg3[%89] : memref<8xf32, #tpu.memory_space<smem>>
    %cst_52 = arith.constant 0.000000e+00 : f32
    %91 = arith.select %88, %cst_52, %90 : f32
    %92 = vector.broadcast %87 : f32 to vector<4x256xf32>
    %93 = arith.mulf %92, %68 : vector<4x256xf32>
    %94 = arith.addf %93, %85 : vector<4x256xf32>
    %c2_53 = arith.constant 2 : index
    %c0_54 = arith.constant 0 : index
    %c0_55 = arith.constant 0 : index
    %95 = vector.load %arg5[%c2_53, %c0_54, %c0_55] : memref<8x4x256xf32, #tpu.memory_space<vmem>>, vector<1x4x256xf32>
    %96 = vector.shape_cast %95 : vector<1x4x256xf32> to vector<4x256xf32>
    %97 = vector.broadcast %91 : f32 to vector<4x256xf32>
    %98 = arith.mulf %97, %96 : vector<4x256xf32>
    %99 = arith.addf %94, %98 : vector<4x256xf32>
    %c8_i32_56 = arith.constant 8 : i32
    %100 = arith.muli %arg1, %c8_i32_56 : i32
    %c3_i32 = arith.constant 3 : i32
    %101 = arith.addi %100, %c3_i32 : i32
    %cst_57 = arith.constant dense<0.000000e+00> : vector<32x256xf32>
    %102 = tpu.matmul %5, %99, %cst_57 {dimension_numbers = #tpu.dot_dimension_numbers<[1], [0], [0], [1], [0, 0, 1, 1], [], []>} : vector<32x4xf32>, vector<4x256xf32>, vector<32x256xf32> -> vector<32x256xf32>
    %103 = arith.addf %102, %4 : vector<32x256xf32>
    %c3 = arith.constant 3 : index
    %c0_58 = arith.constant 0 : index
    %c0_59 = arith.constant 0 : index
    %104 = vector.load %arg7[%c3, %c0_58, %c0_59] : memref<8x32x1xf32, #tpu.memory_space<vmem>>, vector<1x32x1xf32>
    %105 = vector.shape_cast %104 : vector<1x32x1xf32> to vector<32x1xf32>
    %106 = vector.broadcast %105 : vector<32x1xf32> to vector<32x256xf32>
    %107 = arith.addf %103, %106 : vector<32x256xf32>
    %cst_60 = arith.constant 0.000000e+00 : f32
    %108 = vector.broadcast %cst_60 : f32 to vector<32x256xf32>
    %109 = arith.maximumf %107, %108 : vector<32x256xf32>
    %c3_61 = arith.constant 3 : index
    %c0_62 = arith.constant 0 : index
    %c0_63 = arith.constant 0 : index
    %110 = vector.load %arg9[%c3_61, %c0_62, %c0_63] : memref<8x4x32xf32, #tpu.memory_space<vmem>>, vector<1x4x32xf32>
    %111 = vector.shape_cast %110 : vector<1x4x32xf32> to vector<4x32xf32>
    %cst_64 = arith.constant dense<0.000000e+00> : vector<4x256xf32>
    %112 = tpu.matmul %111, %109, %cst_64 {dimension_numbers = #tpu.dot_dimension_numbers<[1], [0], [0], [1], [0, 0, 1, 1], [], []>} : vector<4x32xf32>, vector<32x256xf32>, vector<4x256xf32> -> vector<4x256xf32>
    %c3_65 = arith.constant 3 : index
    %c0_66 = arith.constant 0 : index
    %c0_67 = arith.constant 0 : index
    %113 = vector.load %arg10[%c3_65, %c0_66, %c0_67] : memref<8x4x1xf32, #tpu.memory_space<vmem>>, vector<1x4x1xf32>
    %114 = vector.shape_cast %113 : vector<1x4x1xf32> to vector<4x1xf32>
    %115 = vector.broadcast %114 : vector<4x1xf32> to vector<4x256xf32>
    %116 = arith.addf %112, %115 : vector<4x256xf32>
    %117 = arith.index_cast %101 : i32 to index
    %118 = memref.load %arg2[%117] : memref<8xf32, #tpu.memory_space<smem>>
    %c7_i32_68 = arith.constant 7 : i32
    %119 = arith.cmpi eq, %101, %c7_i32_68 : i32
    %120 = arith.index_cast %101 : i32 to index
    %121 = memref.load %arg3[%120] : memref<8xf32, #tpu.memory_space<smem>>
    %cst_69 = arith.constant 0.000000e+00 : f32
    %122 = arith.select %119, %cst_69, %121 : f32
    %123 = vector.broadcast %118 : f32 to vector<4x256xf32>
    %124 = arith.mulf %123, %99 : vector<4x256xf32>
    %125 = arith.addf %124, %116 : vector<4x256xf32>
    %c3_70 = arith.constant 3 : index
    %c0_71 = arith.constant 0 : index
    %c0_72 = arith.constant 0 : index
    %126 = vector.load %arg5[%c3_70, %c0_71, %c0_72] : memref<8x4x256xf32, #tpu.memory_space<vmem>>, vector<1x4x256xf32>
    %127 = vector.shape_cast %126 : vector<1x4x256xf32> to vector<4x256xf32>
    %128 = vector.broadcast %122 : f32 to vector<4x256xf32>
    %129 = arith.mulf %128, %127 : vector<4x256xf32>
    %130 = arith.addf %125, %129 : vector<4x256xf32>
    %c8_i32_73 = arith.constant 8 : i32
    %131 = arith.muli %arg1, %c8_i32_73 : i32
    %c4_i32 = arith.constant 4 : i32
    %132 = arith.addi %131, %c4_i32 : i32
    %cst_74 = arith.constant dense<0.000000e+00> : vector<32x256xf32>
    %133 = tpu.matmul %5, %130, %cst_74 {dimension_numbers = #tpu.dot_dimension_numbers<[1], [0], [0], [1], [0, 0, 1, 1], [], []>} : vector<32x4xf32>, vector<4x256xf32>, vector<32x256xf32> -> vector<32x256xf32>
    %134 = arith.addf %133, %4 : vector<32x256xf32>
    %c4 = arith.constant 4 : index
    %c0_75 = arith.constant 0 : index
    %c0_76 = arith.constant 0 : index
    %135 = vector.load %arg7[%c4, %c0_75, %c0_76] : memref<8x32x1xf32, #tpu.memory_space<vmem>>, vector<1x32x1xf32>
    %136 = vector.shape_cast %135 : vector<1x32x1xf32> to vector<32x1xf32>
    %137 = vector.broadcast %136 : vector<32x1xf32> to vector<32x256xf32>
    %138 = arith.addf %134, %137 : vector<32x256xf32>
    %cst_77 = arith.constant 0.000000e+00 : f32
    %139 = vector.broadcast %cst_77 : f32 to vector<32x256xf32>
    %140 = arith.maximumf %138, %139 : vector<32x256xf32>
    %c4_78 = arith.constant 4 : index
    %c0_79 = arith.constant 0 : index
    %c0_80 = arith.constant 0 : index
    %141 = vector.load %arg9[%c4_78, %c0_79, %c0_80] : memref<8x4x32xf32, #tpu.memory_space<vmem>>, vector<1x4x32xf32>
    %142 = vector.shape_cast %141 : vector<1x4x32xf32> to vector<4x32xf32>
    %cst_81 = arith.constant dense<0.000000e+00> : vector<4x256xf32>
    %143 = tpu.matmul %142, %140, %cst_81 {dimension_numbers = #tpu.dot_dimension_numbers<[1], [0], [0], [1], [0, 0, 1, 1], [], []>} : vector<4x32xf32>, vector<32x256xf32>, vector<4x256xf32> -> vector<4x256xf32>
    %c4_82 = arith.constant 4 : index
    %c0_83 = arith.constant 0 : index
    %c0_84 = arith.constant 0 : index
    %144 = vector.load %arg10[%c4_82, %c0_83, %c0_84] : memref<8x4x1xf32, #tpu.memory_space<vmem>>, vector<1x4x1xf32>
    %145 = vector.shape_cast %144 : vector<1x4x1xf32> to vector<4x1xf32>
    %146 = vector.broadcast %145 : vector<4x1xf32> to vector<4x256xf32>
    %147 = arith.addf %143, %146 : vector<4x256xf32>
    %148 = arith.index_cast %132 : i32 to index
    %149 = memref.load %arg2[%148] : memref<8xf32, #tpu.memory_space<smem>>
    %c7_i32_85 = arith.constant 7 : i32
    %150 = arith.cmpi eq, %132, %c7_i32_85 : i32
    %151 = arith.index_cast %132 : i32 to index
    %152 = memref.load %arg3[%151] : memref<8xf32, #tpu.memory_space<smem>>
    %cst_86 = arith.constant 0.000000e+00 : f32
    %153 = arith.select %150, %cst_86, %152 : f32
    %154 = vector.broadcast %149 : f32 to vector<4x256xf32>
    %155 = arith.mulf %154, %130 : vector<4x256xf32>
    %156 = arith.addf %155, %147 : vector<4x256xf32>
    %c4_87 = arith.constant 4 : index
    %c0_88 = arith.constant 0 : index
    %c0_89 = arith.constant 0 : index
    %157 = vector.load %arg5[%c4_87, %c0_88, %c0_89] : memref<8x4x256xf32, #tpu.memory_space<vmem>>, vector<1x4x256xf32>
    %158 = vector.shape_cast %157 : vector<1x4x256xf32> to vector<4x256xf32>
    %159 = vector.broadcast %153 : f32 to vector<4x256xf32>
    %160 = arith.mulf %159, %158 : vector<4x256xf32>
    %161 = arith.addf %156, %160 : vector<4x256xf32>
    %c8_i32_90 = arith.constant 8 : i32
    %162 = arith.muli %arg1, %c8_i32_90 : i32
    %c5_i32 = arith.constant 5 : i32
    %163 = arith.addi %162, %c5_i32 : i32
    %cst_91 = arith.constant dense<0.000000e+00> : vector<32x256xf32>
    %164 = tpu.matmul %5, %161, %cst_91 {dimension_numbers = #tpu.dot_dimension_numbers<[1], [0], [0], [1], [0, 0, 1, 1], [], []>} : vector<32x4xf32>, vector<4x256xf32>, vector<32x256xf32> -> vector<32x256xf32>
    %165 = arith.addf %164, %4 : vector<32x256xf32>
    %c5 = arith.constant 5 : index
    %c0_92 = arith.constant 0 : index
    %c0_93 = arith.constant 0 : index
    %166 = vector.load %arg7[%c5, %c0_92, %c0_93] : memref<8x32x1xf32, #tpu.memory_space<vmem>>, vector<1x32x1xf32>
    %167 = vector.shape_cast %166 : vector<1x32x1xf32> to vector<32x1xf32>
    %168 = vector.broadcast %167 : vector<32x1xf32> to vector<32x256xf32>
    %169 = arith.addf %165, %168 : vector<32x256xf32>
    %cst_94 = arith.constant 0.000000e+00 : f32
    %170 = vector.broadcast %cst_94 : f32 to vector<32x256xf32>
    %171 = arith.maximumf %169, %170 : vector<32x256xf32>
    %c5_95 = arith.constant 5 : index
    %c0_96 = arith.constant 0 : index
    %c0_97 = arith.constant 0 : index
    %172 = vector.load %arg9[%c5_95, %c0_96, %c0_97] : memref<8x4x32xf32, #tpu.memory_space<vmem>>, vector<1x4x32xf32>
    %173 = vector.shape_cast %172 : vector<1x4x32xf32> to vector<4x32xf32>
    %cst_98 = arith.constant dense<0.000000e+00> : vector<4x256xf32>
    %174 = tpu.matmul %173, %171, %cst_98 {dimension_numbers = #tpu.dot_dimension_numbers<[1], [0], [0], [1], [0, 0, 1, 1], [], []>} : vector<4x32xf32>, vector<32x256xf32>, vector<4x256xf32> -> vector<4x256xf32>
    %c5_99 = arith.constant 5 : index
    %c0_100 = arith.constant 0 : index
    %c0_101 = arith.constant 0 : index
    %175 = vector.load %arg10[%c5_99, %c0_100, %c0_101] : memref<8x4x1xf32, #tpu.memory_space<vmem>>, vector<1x4x1xf32>
    %176 = vector.shape_cast %175 : vector<1x4x1xf32> to vector<4x1xf32>
    %177 = vector.broadcast %176 : vector<4x1xf32> to vector<4x256xf32>
    %178 = arith.addf %174, %177 : vector<4x256xf32>
    %179 = arith.index_cast %163 : i32 to index
    %180 = memref.load %arg2[%179] : memref<8xf32, #tpu.memory_space<smem>>
    %c7_i32_102 = arith.constant 7 : i32
    %181 = arith.cmpi eq, %163, %c7_i32_102 : i32
    %182 = arith.index_cast %163 : i32 to index
    %183 = memref.load %arg3[%182] : memref<8xf32, #tpu.memory_space<smem>>
    %cst_103 = arith.constant 0.000000e+00 : f32
    %184 = arith.select %181, %cst_103, %183 : f32
    %185 = vector.broadcast %180 : f32 to vector<4x256xf32>
    %186 = arith.mulf %185, %161 : vector<4x256xf32>
    %187 = arith.addf %186, %178 : vector<4x256xf32>
    %c5_104 = arith.constant 5 : index
    %c0_105 = arith.constant 0 : index
    %c0_106 = arith.constant 0 : index
    %188 = vector.load %arg5[%c5_104, %c0_105, %c0_106] : memref<8x4x256xf32, #tpu.memory_space<vmem>>, vector<1x4x256xf32>
    %189 = vector.shape_cast %188 : vector<1x4x256xf32> to vector<4x256xf32>
    %190 = vector.broadcast %184 : f32 to vector<4x256xf32>
    %191 = arith.mulf %190, %189 : vector<4x256xf32>
    %192 = arith.addf %187, %191 : vector<4x256xf32>
    %c8_i32_107 = arith.constant 8 : i32
    %193 = arith.muli %arg1, %c8_i32_107 : i32
    %c6_i32 = arith.constant 6 : i32
    %194 = arith.addi %193, %c6_i32 : i32
    %cst_108 = arith.constant dense<0.000000e+00> : vector<32x256xf32>
    %195 = tpu.matmul %5, %192, %cst_108 {dimension_numbers = #tpu.dot_dimension_numbers<[1], [0], [0], [1], [0, 0, 1, 1], [], []>} : vector<32x4xf32>, vector<4x256xf32>, vector<32x256xf32> -> vector<32x256xf32>
    %196 = arith.addf %195, %4 : vector<32x256xf32>
    %c6 = arith.constant 6 : index
    %c0_109 = arith.constant 0 : index
    %c0_110 = arith.constant 0 : index
    %197 = vector.load %arg7[%c6, %c0_109, %c0_110] : memref<8x32x1xf32, #tpu.memory_space<vmem>>, vector<1x32x1xf32>
    %198 = vector.shape_cast %197 : vector<1x32x1xf32> to vector<32x1xf32>
    %199 = vector.broadcast %198 : vector<32x1xf32> to vector<32x256xf32>
    %200 = arith.addf %196, %199 : vector<32x256xf32>
    %cst_111 = arith.constant 0.000000e+00 : f32
    %201 = vector.broadcast %cst_111 : f32 to vector<32x256xf32>
    %202 = arith.maximumf %200, %201 : vector<32x256xf32>
    %c6_112 = arith.constant 6 : index
    %c0_113 = arith.constant 0 : index
    %c0_114 = arith.constant 0 : index
    %203 = vector.load %arg9[%c6_112, %c0_113, %c0_114] : memref<8x4x32xf32, #tpu.memory_space<vmem>>, vector<1x4x32xf32>
    %204 = vector.shape_cast %203 : vector<1x4x32xf32> to vector<4x32xf32>
    %cst_115 = arith.constant dense<0.000000e+00> : vector<4x256xf32>
    %205 = tpu.matmul %204, %202, %cst_115 {dimension_numbers = #tpu.dot_dimension_numbers<[1], [0], [0], [1], [0, 0, 1, 1], [], []>} : vector<4x32xf32>, vector<32x256xf32>, vector<4x256xf32> -> vector<4x256xf32>
    %c6_116 = arith.constant 6 : index
    %c0_117 = arith.constant 0 : index
    %c0_118 = arith.constant 0 : index
    %206 = vector.load %arg10[%c6_116, %c0_117, %c0_118] : memref<8x4x1xf32, #tpu.memory_space<vmem>>, vector<1x4x1xf32>
    %207 = vector.shape_cast %206 : vector<1x4x1xf32> to vector<4x1xf32>
    %208 = vector.broadcast %207 : vector<4x1xf32> to vector<4x256xf32>
    %209 = arith.addf %205, %208 : vector<4x256xf32>
    %210 = arith.index_cast %194 : i32 to index
    %211 = memref.load %arg2[%210] : memref<8xf32, #tpu.memory_space<smem>>
    %c7_i32_119 = arith.constant 7 : i32
    %212 = arith.cmpi eq, %194, %c7_i32_119 : i32
    %213 = arith.index_cast %194 : i32 to index
    %214 = memref.load %arg3[%213] : memref<8xf32, #tpu.memory_space<smem>>
    %cst_120 = arith.constant 0.000000e+00 : f32
    %215 = arith.select %212, %cst_120, %214 : f32
    %216 = vector.broadcast %211 : f32 to vector<4x256xf32>
    %217 = arith.mulf %216, %192 : vector<4x256xf32>
    %218 = arith.addf %217, %209 : vector<4x256xf32>
    %c6_121 = arith.constant 6 : index
    %c0_122 = arith.constant 0 : index
    %c0_123 = arith.constant 0 : index
    %219 = vector.load %arg5[%c6_121, %c0_122, %c0_123] : memref<8x4x256xf32, #tpu.memory_space<vmem>>, vector<1x4x256xf32>
    %220 = vector.shape_cast %219 : vector<1x4x256xf32> to vector<4x256xf32>
    %221 = vector.broadcast %215 : f32 to vector<4x256xf32>
    %222 = arith.mulf %221, %220 : vector<4x256xf32>
    %223 = arith.addf %218, %222 : vector<4x256xf32>
    %c8_i32_124 = arith.constant 8 : i32
    %224 = arith.muli %arg1, %c8_i32_124 : i32
    %c7_i32_125 = arith.constant 7 : i32
    %225 = arith.addi %224, %c7_i32_125 : i32
    %cst_126 = arith.constant dense<0.000000e+00> : vector<32x256xf32>
    %226 = tpu.matmul %5, %223, %cst_126 {dimension_numbers = #tpu.dot_dimension_numbers<[1], [0], [0], [1], [0, 0, 1, 1], [], []>} : vector<32x4xf32>, vector<4x256xf32>, vector<32x256xf32> -> vector<32x256xf32>
    %227 = arith.addf %226, %4 : vector<32x256xf32>
    %c7 = arith.constant 7 : index
    %c0_127 = arith.constant 0 : index
    %c0_128 = arith.constant 0 : index
    %228 = vector.load %arg7[%c7, %c0_127, %c0_128] : memref<8x32x1xf32, #tpu.memory_space<vmem>>, vector<1x32x1xf32>
    %229 = vector.shape_cast %228 : vector<1x32x1xf32> to vector<32x1xf32>
    %230 = vector.broadcast %229 : vector<32x1xf32> to vector<32x256xf32>
    %231 = arith.addf %227, %230 : vector<32x256xf32>
    %cst_129 = arith.constant 0.000000e+00 : f32
    %232 = vector.broadcast %cst_129 : f32 to vector<32x256xf32>
    %233 = arith.maximumf %231, %232 : vector<32x256xf32>
    %c7_130 = arith.constant 7 : index
    %c0_131 = arith.constant 0 : index
    %c0_132 = arith.constant 0 : index
    %234 = vector.load %arg9[%c7_130, %c0_131, %c0_132] : memref<8x4x32xf32, #tpu.memory_space<vmem>>, vector<1x4x32xf32>
    %235 = vector.shape_cast %234 : vector<1x4x32xf32> to vector<4x32xf32>
    %cst_133 = arith.constant dense<0.000000e+00> : vector<4x256xf32>
    %236 = tpu.matmul %235, %233, %cst_133 {dimension_numbers = #tpu.dot_dimension_numbers<[1], [0], [0], [1], [0, 0, 1, 1], [], []>} : vector<4x32xf32>, vector<32x256xf32>, vector<4x256xf32> -> vector<4x256xf32>
    %c7_134 = arith.constant 7 : index
    %c0_135 = arith.constant 0 : index
    %c0_136 = arith.constant 0 : index
    %237 = vector.load %arg10[%c7_134, %c0_135, %c0_136] : memref<8x4x1xf32, #tpu.memory_space<vmem>>, vector<1x4x1xf32>
    %238 = vector.shape_cast %237 : vector<1x4x1xf32> to vector<4x1xf32>
    %239 = vector.broadcast %238 : vector<4x1xf32> to vector<4x256xf32>
    %240 = arith.addf %236, %239 : vector<4x256xf32>
    %241 = arith.index_cast %225 : i32 to index
    %242 = memref.load %arg2[%241] : memref<8xf32, #tpu.memory_space<smem>>
    %c7_i32_137 = arith.constant 7 : i32
    %243 = arith.cmpi eq, %225, %c7_i32_137 : i32
    %244 = arith.index_cast %225 : i32 to index
    %245 = memref.load %arg3[%244] : memref<8xf32, #tpu.memory_space<smem>>
    %cst_138 = arith.constant 0.000000e+00 : f32
    %246 = arith.select %243, %cst_138, %245 : f32
    %247 = vector.broadcast %242 : f32 to vector<4x256xf32>
    %248 = arith.mulf %247, %223 : vector<4x256xf32>
    %249 = arith.addf %248, %240 : vector<4x256xf32>
    %c7_139 = arith.constant 7 : index
    %c0_140 = arith.constant 0 : index
    %c0_141 = arith.constant 0 : index
    %250 = vector.load %arg5[%c7_139, %c0_140, %c0_141] : memref<8x4x256xf32, #tpu.memory_space<vmem>>, vector<1x4x256xf32>
    %251 = vector.shape_cast %250 : vector<1x4x256xf32> to vector<4x256xf32>
    %252 = vector.broadcast %246 : f32 to vector<4x256xf32>
    %253 = arith.mulf %252, %251 : vector<4x256xf32>
    %254 = arith.addf %249, %253 : vector<4x256xf32>
    %c0_142 = arith.constant 0 : index
    %c0_143 = arith.constant 0 : index
    %255 = vector.load %arg11[%c0_142, %c0_143] : memref<4x256xf32, #tpu.memory_space<vmem>>, vector<4x256xf32>
    tpu.vector_store %arg11[%c0_142, %c0_143], %254 {strides = array<i32>} : memref<4x256xf32, #tpu.memory_space<vmem>>, vector<4x256xf32>,
    return
  }
  func.func @transform_0(%arg0: i32, %arg1: i32, %arg2: memref<8xf32, #tpu.memory_space<smem>>, %arg3: memref<8xf32, #tpu.memory_space<smem>>) -> (i32, i32) {
    %c0_i32 = arith.constant 0 : i32
    %c0_i32_0 = arith.constant 0 : i32
    return %c0_i32, %arg0 : i32, i32
  }
  func.func @transform_1(%arg0: i32, %arg1: i32, %arg2: memref<8xf32, #tpu.memory_space<smem>>, %arg3: memref<8xf32, #tpu.memory_space<smem>>) -> (i32, i32, i32) {
    %c0_i32 = arith.constant 0 : i32
    %c0_i32_0 = arith.constant 0 : i32
    return %arg1, %c0_i32, %arg0 : i32, i32, i32
  }
  func.func @transform_2(%arg0: i32, %arg1: i32, %arg2: memref<8xf32, #tpu.memory_space<smem>>, %arg3: memref<8xf32, #tpu.memory_space<smem>>) -> (i32, i32) {
    %c0_i32 = arith.constant 0 : i32
    %c0_i32_0 = arith.constant 0 : i32
    return %c0_i32, %arg0 : i32, i32
  }
  func.func @transform_3(%arg0: i32, %arg1: i32, %arg2: memref<8xf32, #tpu.memory_space<smem>>, %arg3: memref<8xf32, #tpu.memory_space<smem>>) -> (i32, i32, i32) {
    %c0_i32 = arith.constant 0 : i32
    %c0_i32_0 = arith.constant 0 : i32
    %c0_i32_1 = arith.constant 0 : i32
    return %arg1, %c0_i32, %c0_i32_0 : i32, i32, i32
  }
  func.func @transform_4(%arg0: i32, %arg1: i32, %arg2: memref<8xf32, #tpu.memory_space<smem>>, %arg3: memref<8xf32, #tpu.memory_space<smem>>) -> (i32, i32) {
    %c0_i32 = arith.constant 0 : i32
    %c0_i32_0 = arith.constant 0 : i32
    %c0_i32_1 = arith.constant 0 : i32
    return %c0_i32, %c0_i32_0 : i32, i32
  }
  func.func @transform_5(%arg0: i32, %arg1: i32, %arg2: memref<8xf32, #tpu.memory_space<smem>>, %arg3: memref<8xf32, #tpu.memory_space<smem>>) -> (i32, i32, i32) {
    %c0_i32 = arith.constant 0 : i32
    %c0_i32_0 = arith.constant 0 : i32
    %c0_i32_1 = arith.constant 0 : i32
    return %arg1, %c0_i32, %c0_i32_0 : i32, i32, i32
  }
  func.func @transform_6(%arg0: i32, %arg1: i32, %arg2: memref<8xf32, #tpu.memory_space<smem>>, %arg3: memref<8xf32, #tpu.memory_space<smem>>) -> (i32, i32, i32) {
    %c0_i32 = arith.constant 0 : i32
    %c0_i32_0 = arith.constant 0 : i32
    %c0_i32_1 = arith.constant 0 : i32
    return %arg1, %c0_i32, %c0_i32_0 : i32, i32, i32
  }
  func.func @transform_7(%arg0: i32, %arg1: i32, %arg2: memref<8xf32, #tpu.memory_space<smem>>, %arg3: memref<8xf32, #tpu.memory_space<smem>>) -> (i32, i32) {
    %c0_i32 = arith.constant 0 : i32
    %c0_i32_0 = arith.constant 0 : i32
    return %c0_i32, %arg0 : i32, i32
  }
}

</mosaic_0001>

<llo_original>
// kernel: tpu_custom_call.1
$region0: #{tpu_custom_call.1}
  #allocation0 [shape = 'u32[]', space=smem, size = 0x4, offset = 0x4, fixed_abs, tag = 'smem constant byte address 0x4 - core index']
  #allocation1 [shape = 'u32[144,128]{1,0:T(1,128)}', space=vmem, size = 0x12000, scoped, tag = 'internal scratch']
  #allocation2 [shape = 's32[1]{0}', space=sflag, size = 0x4, scoped, tag = 'scoped memory for tpu_custom_call.1']
  #allocation3 [shape = 'u8[512]{0}', space=smem, size = 0x200, scoped, tag = 'prefetched SMEM operand 0']
  #allocation4 [shape = 'u8[512]{0}', space=smem, size = 0x200, scoped, tag = 'prefetched SMEM operand 1']
  %s0 = inlined_call_operand.vmem [shape: f32[8], index: 0, kind: input, shape index: {}]
  %s1 = inlined_call_operand.vmem [shape: f32[8], index: 1, kind: input, shape index: {}]
  %s2 = inlined_call_operand.vmem [shape: f32[4,512], index: 2, kind: input, shape index: {}]
  %s3 = inlined_call_operand.vmem [shape: f32[8,4,512], index: 3, kind: input, shape index: {}]
  %s4 = inlined_call_operand.vmem [shape: bf16[32,512], index: 4, kind: input, shape index: {}]
  %s5 = inlined_call_operand.vmem [shape: f32[8,32,1], index: 5, kind: input, shape index: {}]
  %s6 = inlined_call_operand.vmem [shape: f32[32,4], index: 6, kind: input, shape index: {}]
  %s7 = inlined_call_operand.vmem [shape: f32[8,4,32], index: 7, kind: input, shape index: {}]
  %s8 = inlined_call_operand.vmem [shape: f32[8,4,1], index: 8, kind: input, shape index: {}]
  %s9 = inlined_call_operand.hbm [shape: f32[4,512], index: 9, kind: output, shape index: {}]
  %s10 = sld [smem:[#allocation0]]
  $region141: #{tpu_custom_call.1} parent=0
    _
  %s12 = ssub.s32 1, %s10
  %s13 = scalar_select 0, %s12, %s10
  %s14 = sshll.u32 %s0, 4
  %s15 = int_to_ptr.vmem [resolvable:$true] %s14
  %17 = dma.vmem_to_smem %s15, 16, [#allocation3], [#allocation2]
  %s18 = sshll.u32 %s1, 4
  %s19 = int_to_ptr.vmem [resolvable:$true] %s18
  %21 = dma.vmem_to_smem %s19, 16, [#allocation4], [#allocation2]
  %22 = dma.done [#allocation2], 32
  %23 = sfence
  $region1: #{tpu_custom_call.1} parent=0
    #allocation5 [shape = 'u8[65536]{0}', space=vmem, size = 0x10000, scoped, tag = 'input window, operand 3']
    #allocation6 [shape = 'u8[32768]{0}', space=vmem, size = 0x8000, scoped, tag = 'input window, operand 4']
    #allocation7 [shape = 'u8[8192]{0}', space=vmem, size = 0x2000, scoped, tag = 'output window, operand 0']
    #allocation8 [shape = 's32[2]{0}', space=sflag, size = 0x8, scoped, tag = 'scoped memory for tpu_custom_call.1']
    %24 = vsyncpa [#allocation8], 0
    %s25 = scalar_lea.sflag [#allocation8], 1
    %26 = vsyncpa %s25, 0
    loop: start=0, step=1, limit=4
    $region2: #{tpu_custom_call.1} parent=1 // loop_pre_header
      _
    $region3: #{tpu_custom_call.1} parent=1 // loop_header
      %s28 = sphi 0, %s32
      %p29 = scmp.ge.s32.totalorder %s28, 4
      %s35 = sphi 0, %s47
      %s36 = sphi 0, %s43
      %s37 = sphi 0, %s35
      %s38 = sphi 0, %s36
      %s39 = sphi 0, %s37
      %s40 = sphi 0, %s38
      %s50 = sphi 0, %s52
      %s53 = sphi 0, %s50
      %s54 = sphi 0, %s53
      %s70 = sphi 0, %s54
      %s78 = sphi 0, %s80
      %s81 = sphi 0, %s78
      %s82 = sphi 0, %s81
      %s98 = sphi 0, %s82
      %s104 = sphi 0, %s106
      %s107 = sphi 0, %s104
      %s108 = sphi 0, %s107
      %s124 = sphi 0, %s108
      %s130 = sphi 0, %s132
      %s133 = sphi 0, %s130
      %s134 = sphi 0, %s133
      %s150 = sphi 0, %s134
      %s154 = sphi 0, %s154
      %s156 = sphi 0, %s154
      %s157 = sphi 0, %s156
      %s171 = sphi 0, %s157
      %s177 = sphi 0, %s179
      %s180 = sphi 0, %s177
      %s181 = sphi 0, %s180
      %s197 = sphi 0, %s181
      %s203 = sphi 0, %s205
      %s206 = sphi 0, %s203
      %s207 = sphi 0, %s206
      %s223 = sphi 0, %s207
      %s229 = sphi 0, %s231
      %s232 = sphi 0, %s229
      %s233 = sphi 0, %s232
      %s249 = sphi 0, %s233
    $region4: #{tpu_custom_call.1} parent=1 // loop_header_branch
      %31 = sbr.rel (%p29) target = $region8
    $region5: #{tpu_custom_call.1} parent=1 // loop_body
      %s33 = ssub.s32 %s28, 1
      %s34 = ssub.s32 %s28, 2
      %s41 = sadd.s32 1, %s36
      %p42 = scmp.ge.s32.totalorder %s41, 1
      %s43 = scalar_select %p42, 0, %s41
      %s44 = sadd.s32 1, %s35
      %s45 = scalar_select %p42, %s44, %s35
      %p46 = scmp.ge.s32.totalorder %s45, 2
      %s47 = scalar_select %p46, 0, %s45
      %s48 = ssub.s32 %s35, %s47
      %p49 = scmp.eq.s32.totalorder %s48, 0
      %s51 = sadd.s32 %s50, 1
      %s52 = scalar_select %p49, %s50, %s51
      %p55 = pneg %p49
      %p56 = scmp.eq.s32.totalorder %s28, 1
      %p57 = por %p55, %p56
      %p58 = scmp.ne.s32.totalorder %s50, %s53
      %p59 = scmp.eq.s32.totalorder %s28, 0
      %p60 = por %p58, %p59
      %p61 = scmp.ne.s32.totalorder %s50, %s53
      %p62 = scmp.eq.s32.totalorder %s33, 1
      %p63 = por %p61, %p62
      %p64 = scmp.ne.s32.totalorder %s53, %s54
      %p65 = scmp.eq.s32.totalorder %s33, 0
      %p66 = por %p64, %p65
      %p67 = scmp.ne.s32.totalorder %s53, %s54
      %p68 = scmp.eq.s32.totalorder %s34, 1
      %p69 = por %p67, %p68
      %p71 = scmp.ne.s32.totalorder %s54, %s70
      %p72 = scmp.eq.s32.totalorder %s34, 0
      %p73 = por %p71, %p72
      %s74 = ssub.s32 %s36, %s43
      %s75 = ssub.s32 %s35, %s47
      %s76 = sor.u32 %s74, %s75
      %p77 = scmp.eq.s32.totalorder %s76, 0
      %s79 = sadd.s32 %s78, 1
      %s80 = scalar_select %p77, %s78, %s79
      %p83 = pneg %p77
      %p84 = scmp.eq.s32.totalorder %s28, 1
      %p85 = por %p83, %p84
      %p86 = scmp.ne.s32.totalorder %s78, %s81
      %p87 = scmp.eq.s32.totalorder %s28, 0
      %p88 = por %p86, %p87
      %p89 = scmp.ne.s32.totalorder %s78, %s81
      %p90 = scmp.eq.s32.totalorder %s33, 1
      %p91 = por %p89, %p90
      %p92 = scmp.ne.s32.totalorder %s81, %s82
      %p93 = scmp.eq.s32.totalorder %s33, 0
      %p94 = por %p92, %p93
      %p95 = scmp.ne.s32.totalorder %s81, %s82
      %p96 = scmp.eq.s32.totalorder %s34, 1
      %p97 = por %p95, %p96
      %p99 = scmp.ne.s32.totalorder %s82, %s98
      %p100 = scmp.eq.s32.totalorder %s34, 0
      %p101 = por %p99, %p100
      %s102 = ssub.s32 %s35, %s47
      %p103 = scmp.eq.s32.totalorder %s102, 0
      %s105 = sadd.s32 %s104, 1
      %s106 = scalar_select %p103, %s104, %s105
      %p109 = pneg %p103
      %p110 = scmp.eq.s32.totalorder %s28, 1
      %p111 = por %p109, %p110
      %p112 = scmp.ne.s32.totalorder %s104, %s107
      %p113 = scmp.eq.s32.totalorder %s28, 0
      %p114 = por %p112, %p113
      %p115 = scmp.ne.s32.totalorder %s104, %s107
      %p116 = scmp.eq.s32.totalorder %s33, 1
      %p117 = por %p115, %p116
      %p118 = scmp.ne.s32.totalorder %s107, %s108
      %p119 = scmp.eq.s32.totalorder %s33, 0
      %p120 = por %p118, %p119
      %p121 = scmp.ne.s32.totalorder %s107, %s108
      %p122 = scmp.eq.s32.totalorder %s34, 1
      %p123 = por %p121, %p122
      %p125 = scmp.ne.s32.totalorder %s108, %s124
      %p126 = scmp.eq.s32.totalorder %s34, 0
      %p127 = por %p125, %p126
      %s128 = ssub.s32 %s36, %s43
      %p129 = scmp.eq.s32.totalorder %s128, 0
      %s131 = sadd.s32 %s130, 1
      %s132 = scalar_select %p129, %s130, %s131
      %p135 = pneg %p129
      %p136 = scmp.eq.s32.totalorder %s28, 1
      %p137 = por %p135, %p136
      %p138 = scmp.ne.s32.totalorder %s130, %s133
      %p139 = scmp.eq.s32.totalorder %s28, 0
      %p140 = por %p138, %p139
      %p141 = scmp.ne.s32.totalorder %s130, %s133
      %p142 = scmp.eq.s32.totalorder %s33, 1
      %p143 = por %p141, %p142
      %p144 = scmp.ne.s32.totalorder %s133, %s134
      %p145 = scmp.eq.s32.totalorder %s33, 0
      %p146 = por %p144, %p145
      %p147 = scmp.ne.s32.totalorder %s133, %s134
      %p148 = scmp.eq.s32.totalorder %s34, 1
      %p149 = por %p147, %p148
      %p151 = scmp.ne.s32.totalorder %s134, %s150
      %p152 = scmp.eq.s32.totalorder %s34, 0
      %p153 = por %p151, %p152
      %s155 = sadd.s32 %s154, 1
      %p158 = scmp.eq.s32.totalorder %s28, 1
      %p159 = scmp.ne.s32.totalorder %s154, %s156
      %p160 = scmp.eq.s32.totalorder %s28, 0
      %p161 = por %p159, %p160
      %p162 = scmp.ne.s32.totalorder %s154, %s156
      %p163 = scmp.eq.s32.totalorder %s33, 1
      %p164 = por %p162, %p163
      %p165 = scmp.ne.s32.totalorder %s156, %s157
      %p166 = scmp.eq.s32.totalorder %s33, 0
      %p167 = por %p165, %p166
      %p168 = scmp.ne.s32.totalorder %s156, %s157
      %p169 = scmp.eq.s32.totalorder %s34, 1
      %p170 = por %p168, %p169
      %p172 = scmp.ne.s32.totalorder %s157, %s171
      %p173 = scmp.eq.s32.totalorder %s34, 0
      %p174 = por %p172, %p173
      %s175 = ssub.s32 %s36, %s43
      %p176 = scmp.eq.s32.totalorder %s175, 0
      %s178 = sadd.s32 %s177, 1
      %s179 = scalar_select %p176, %s177, %s178
      %p182 = pneg %p176
      %p183 = scmp.eq.s32.totalorder %s28, 1
      %p184 = por %p182, %p183
      %p185 = scmp.ne.s32.totalorder %s177, %s180
      %p186 = scmp.eq.s32.totalorder %s28, 0
      %p187 = por %p185, %p186
      %p188 = scmp.ne.s32.totalorder %s177, %s180
      %p189 = scmp.eq.s32.totalorder %s33, 1
      %p190 = por %p188, %p189
      %p191 = scmp.ne.s32.totalorder %s180, %s181
      %p192 = scmp.eq.s32.totalorder %s33, 0
      %p193 = por %p191, %p192
      %p194 = scmp.ne.s32.totalorder %s180, %s181
      %p195 = scmp.eq.s32.totalorder %s34, 1
      %p196 = por %p194, %p195
      %p198 = scmp.ne.s32.totalorder %s181, %s197
      %p199 = scmp.eq.s32.totalorder %s34, 0
      %p200 = por %p198, %p199
      %s201 = ssub.s32 %s36, %s43
      %p202 = scmp.eq.s32.totalorder %s201, 0
      %s204 = sadd.s32 %s203, 1
      %s205 = scalar_select %p202, %s203, %s204
      %p208 = pneg %p202
      %p209 = scmp.eq.s32.totalorder %s28, 1
      %p210 = por %p208, %p209
      %p211 = scmp.ne.s32.totalorder %s203, %s206
      %p212 = scmp.eq.s32.totalorder %s28, 0
      %p213 = por %p211, %p212
      %p214 = scmp.ne.s32.totalorder %s203, %s206
      %p215 = scmp.eq.s32.totalorder %s33, 1
      %p216 = por %p214, %p215
      %p217 = scmp.ne.s32.totalorder %s206, %s207
      %p218 = scmp.eq.s32.totalorder %s33, 0
      %p219 = por %p217, %p218
      %p220 = scmp.ne.s32.totalorder %s206, %s207
      %p221 = scmp.eq.s32.totalorder %s34, 1
      %p222 = por %p220, %p221
      %p224 = scmp.ne.s32.totalorder %s207, %s223
      %p225 = scmp.eq.s32.totalorder %s34, 0
      %p226 = por %p224, %p225
      %s227 = ssub.s32 %s35, %s47
      %p228 = scmp.eq.s32.totalorder %s227, 0
      %s230 = sadd.s32 %s229, 1
      %s231 = scalar_select %p228, %s229, %s230
      %p234 = pneg %p228
      %p235 = scmp.eq.s32.totalorder %s28, 1
      %p236 = por %p234, %p235
      %p237 = scmp.ne.s32.totalorder %s229, %s232
      %p238 = scmp.eq.s32.totalorder %s28, 0
      %p239 = por %p237, %p238
      %p240 = scmp.ne.s32.totalorder %s229, %s232
      %p241 = scmp.eq.s32.totalorder %s33, 1
      %p242 = por %p240, %p241
      %p243 = scmp.ne.s32.totalorder %s232, %s233
      %p244 = scmp.eq.s32.totalorder %s33, 0
      %p245 = por %p243, %p244
      %p246 = scmp.ne.s32.totalorder %s232, %s233
      %p247 = scmp.eq.s32.totalorder %s34, 1
      %p248 = por %p246, %p247
      %p250 = scmp.ne.s32.totalorder %s233, %s249
      %p251 = scmp.eq.s32.totalorder %s34, 0
      %p252 = por %p250, %p251
      %p253 = scmp.le.s32.totalorder 1, %s28
      %p254 = scmp.lt.s32.totalorder %s28, 3
      %p255 = pnand %p253, %p254
      %p256 = pneg %p255
      // Predicated region
      $region9: #{tpu_custom_call.1} parent=5 // pred_check
        _
      $region10: #{tpu_custom_call.1} parent=5 // pred_check_branch
        %258 = sbr.rel (%p255) target = $region12
      $region11: #{tpu_custom_call.1} parent=5 // pred_region
        %s259 = ssub.s32 %s28, 1
        // Predicated region
        $region13: #{tpu_custom_call.1} parent=11 // pred_check
          %p260 = pneg %p146
        $region14: #{tpu_custom_call.1} parent=11 // pred_check_branch
          %262 = sbr.rel (%p260) target = $region16
        $region15: #{tpu_custom_call.1} parent=11 // pred_region
          %s263 = smul.u32 8, %s38
          %p264 = scmp.lt.s32.totalorder %s263, 7
          %s265 = scalar_select %p264, %s263, 7
          %s266 = smul.addr %s265, 4
          %s267 = smul.addr %s266, 8
          %s268 = scalar_lea.vmem %s5, %s267
          %s269 = smul.u32 8, %s38
        $region16: #{tpu_custom_call.1} parent=11 // pred_fallthru
          _
        // Predicated region
        $region17: #{tpu_custom_call.1} parent=11 // pred_check
          %p270 = pneg %p167
        $region18: #{tpu_custom_call.1} parent=11 // pred_check_branch
          %272 = sbr.rel (%p270) target = $region20
        $region19: #{tpu_custom_call.1} parent=11 // pred_region
          _
        $region20: #{tpu_custom_call.1} parent=11 // pred_fallthru
          _
        // Predicated region
        $region21: #{tpu_custom_call.1} parent=11 // pred_check
          %p273 = pneg %p193
        $region22: #{tpu_custom_call.1} parent=11 // pred_check_branch
          %275 = sbr.rel (%p273) target = $region24
        $region23: #{tpu_custom_call.1} parent=11 // pred_region
          %s276 = smul.u32 8, %s38
          %p277 = scmp.lt.s32.totalorder %s276, 7
          %s278 = scalar_select %p277, %s276, 7
          %s279 = smul.addr %s278, 4
          %s280 = scalar_lea.vmem %s7, %s279
          %s281 = smul.u32 8, %s38
        $region24: #{tpu_custom_call.1} parent=11 // pred_fallthru
          _
        // Predicated region
        $region25: #{tpu_custom_call.1} parent=11 // pred_check
          %p282 = pneg %p219
        $region26: #{tpu_custom_call.1} parent=11 // pred_check_branch
          %284 = sbr.rel (%p282) target = $region28
        $region27: #{tpu_custom_call.1} parent=11 // pred_region
          %s285 = smul.u32 8, %s38
          %p286 = scmp.lt.s32.totalorder %s285, 7
          %s287 = scalar_select %p286, %s285, 7
          %s288 = smul.addr %s287, 4
          %s289 = scalar_lea.vmem %s8, %s288
          %s290 = smul.u32 8, %s38
        $region28: #{tpu_custom_call.1} parent=11 // pred_fallthru
          _
      $region12: #{tpu_custom_call.1} parent=5 // pred_fallthru
        _
      %p291 = scmp.lt.s32.totalorder %s28, 2
      // Predicated region
      $region29: #{tpu_custom_call.1} parent=5 // pred_check
        %p292 = pneg %p291
      $region30: #{tpu_custom_call.1} parent=5 // pred_check_branch
        %294 = sbr.rel (%p292) target = $region32
      $region31: #{tpu_custom_call.1} parent=5 // pred_region
        // Predicated region
        $region33: #{tpu_custom_call.1} parent=31 // pred_check
          %p295 = pneg %p60
        $region34: #{tpu_custom_call.1} parent=31 // pred_check_branch
          %297 = sbr.rel (%p295) target = $region36
        $region35: #{tpu_custom_call.1} parent=31 // pred_region
          %s298 = smul.u32 2, %s35
          %p299 = scmp.lt.s32.totalorder %s298, 3
          %s300 = scalar_select %p299, %s298, 3
          %s301 = smul.addr %s300, 4
          %s302 = scalar_lea.vmem %s2, %s301
          %s303 = smul.u32 2, %s35
        $region36: #{tpu_custom_call.1} parent=31 // pred_fallthru
          _
        // Predicated region
        $region37: #{tpu_custom_call.1} parent=31 // pred_check
          %p304 = pneg %p88
        $region38: #{tpu_custom_call.1} parent=31 // pred_check_branch
          %306 = sbr.rel (%p304) target = $region40
        $region39: #{tpu_custom_call.1} parent=31 // pred_region
          %s307 = sand.u32 %s78, 1
          %s308 = sand.u32 %s78, 1
          %s309 = smul.addr %s308, 64
          %s310 = scalar_lea.vmem [#allocation5], %s309
          %s311 = smul.u32 8, %s36
          %s312 = smul.u32 2, %s35
          %s313 = smul.addr %s311, 4
          %s314 = sadd.s32 %s312, %s313
          %s315 = smul.addr %s314, 4
          %s316 = scalar_lea.vmem %s3, %s315
          // Predicated region
          $region41: #{tpu_custom_call.1} parent=39 // pred_check
            _
          $region42: #{tpu_custom_call.1} parent=39 // pred_check_branch
            %318 = sbr.rel (0) target = $region44
          $region43: #{tpu_custom_call.1} parent=39 // pred_region
            // Predicated region
            $region45: #{tpu_custom_call.1} parent=43 // pred_check
              _
            $region46: #{tpu_custom_call.1} parent=43 // pred_check_branch
              %320 = sbr.rel (0) target = $region48
            $region47: #{tpu_custom_call.1} parent=43 // pred_region
              // Predicated region
              $region60: #{tpu_custom_call.1} parent=47 // pred_check
                _
              $region61: #{tpu_custom_call.1} parent=47 // pred_check_branch
                %349 = sbr.rel (0) target = $region63
              $region62: #{tpu_custom_call.1} parent=47 // pred_region
                loop: start=0, step=1, limit=1
                $region64: #{tpu_custom_call.1} parent=62 // loop_pre_header
                  _
                $region65: #{tpu_custom_call.1} parent=62 // loop_header
                  %s351 = sphi 0, %s355
                  %p352 = scmp.ge.s32.totalorder %s351, 1
                  %s356 = sphi %s316, %s316
                  %s357 = sphi %s310, %s310
                $region66: #{tpu_custom_call.1} parent=62 // loop_header_branch
                  %354 = sbr.rel (%p352) target = $region70
                $region67: #{tpu_custom_call.1} parent=62 // loop_body
                  %v358 = vld [vmem:[%s356] sm:$0xff]
                  %359 = vst [vmem:[%s357] sm:$0xff] %v358
                  %v360 = vld [vmem:[%s356 + $0x10] sm:$0xff]
                  %361 = vst [vmem:[%s357 + $0x8] sm:$0xff] %v360
                  %v362 = vld [vmem:[%s356 + $0x20] sm:$0xff]
                  %363 = vst [vmem:[%s357 + $0x10] sm:$0xff] %v362
                  %v364 = vld [vmem:[%s356 + $0x30] sm:$0xff]
                  %365 = vst [vmem:[%s357 + $0x18] sm:$0xff] %v364
                  %v366 = vld [vmem:[%s356 + $0x40] sm:$0xff]
                  %367 = vst [vmem:[%s357 + $0x20] sm:$0xff] %v366
                  %v368 = vld [vmem:[%s356 + $0x50] sm:$0xff]
                  %369 = vst [vmem:[%s357 + $0x28] sm:$0xff] %v368
                  %v370 = vld [vmem:[%s356 + $0x60] sm:$0xff]
                  %371 = vst [vmem:[%s357 + $0x30] sm:$0xff] %v370
                  %v372 = vld [vmem:[%s356 + $0x70] sm:$0xff]
                  %373 = vst [vmem:[%s357 + $0x38] sm:$0xff] %v372
                $region68: #{tpu_custom_call.1} parent=62 // loop_footer
                  %s355 = sadd.s32 1, %s351
                $region69: #{tpu_custom_call.1} parent=62 // loop_footer_branch
                  %350 = sbr.rel target = $region65
                $region70: #{tpu_custom_call.1} parent=62 // loop_exit
                  _
              $region63: #{tpu_custom_call.1} parent=47 // pred_fallthru
                _
              // Predicated region
              $region71: #{tpu_custom_call.1} parent=47 // pred_check
                _
              $region72: #{tpu_custom_call.1} parent=47 // pred_check_branch
                %375 = sbr.rel target = $region74
              $region73: #{tpu_custom_call.1} parent=47 // pred_region
                _
              $region74: #{tpu_custom_call.1} parent=47 // pred_fallthru
                _
            $region48: #{tpu_custom_call.1} parent=43 // pred_fallthru
              _
            // Predicated region
            $region49: #{tpu_custom_call.1} parent=43 // pred_check
              _
            $region50: #{tpu_custom_call.1} parent=43 // pred_check_branch
              %322 = sbr.rel target = $region52
            $region51: #{tpu_custom_call.1} parent=43 // pred_region
              loop: start=0, step=1, limit=1
              $region53: #{tpu_custom_call.1} parent=51 // loop_pre_header
                _
              $region54: #{tpu_custom_call.1} parent=51 // loop_header
                %s325 = sphi 0, %s329
                %p326 = scmp.ge.s32.totalorder %s325, 1
                %s330 = sphi %s316, %s316
                %s331 = sphi %s310, %s310
              $region55: #{tpu_custom_call.1} parent=51 // loop_header_branch
                %328 = sbr.rel (%p326) target = $region59
              $region56: #{tpu_custom_call.1} parent=51 // loop_body
                %v332 = vld [vmem:[%s330] sm:$0xff]
                %333 = vst [vmem:[%s331] sm:$0xff] %v332
                %v334 = vld [vmem:[%s330 + $0x10] sm:$0xff]
                %335 = vst [vmem:[%s331 + $0x8] sm:$0xff] %v334
                %v336 = vld [vmem:[%s330 + $0x20] sm:$0xff]
                %337 = vst [vmem:[%s331 + $0x10] sm:$0xff] %v336
                %v338 = vld [vmem:[%s330 + $0x30] sm:$0xff]
                %339 = vst [vmem:[%s331 + $0x18] sm:$0xff] %v338
                %v340 = vld [vmem:[%s330 + $0x40] sm:$0xff]
                %341 = vst [vmem:[%s331 + $0x20] sm:$0xff] %v340
                %v342 = vld [vmem:[%s330 + $0x50] sm:$0xff]
                %343 = vst [vmem:[%s331 + $0x28] sm:$0xff] %v342
                %v344 = vld [vmem:[%s330 + $0x60] sm:$0xff]
                %345 = vst [vmem:[%s331 + $0x30] sm:$0xff] %v344
                %v346 = vld [vmem:[%s330 + $0x70] sm:$0xff]
                %347 = vst [vmem:[%s331 + $0x38] sm:$0xff] %v346
              $region57: #{tpu_custom_call.1} parent=51 // loop_footer
                %s329 = sadd.s32 1, %s325
              $region58: #{tpu_custom_call.1} parent=51 // loop_footer_branch
                %324 = sbr.rel target = $region54
              $region59: #{tpu_custom_call.1} parent=51 // loop_exit
                _
            $region52: #{tpu_custom_call.1} parent=43 // pred_fallthru
              _
          $region44: #{tpu_custom_call.1} parent=39 // pred_fallthru
            _
          %376 = vnop
        $region40: #{tpu_custom_call.1} parent=31 // pred_fallthru
          _
        // Predicated region
        $region75: #{tpu_custom_call.1} parent=31 // pred_check
          %p377 = pneg %p114
        $region76: #{tpu_custom_call.1} parent=31 // pred_check_branch
          %379 = sbr.rel (%p377) target = $region78
        $region77: #{tpu_custom_call.1} parent=31 // pred_region
          %s380 = sand.u32 %s104, 1
          %s381 = sand.u32 %s104, 1
          %s382 = smul.addr %s381, 32
          %s383 = scalar_lea.vmem [#allocation6], %s382
          %s384 = smul.u32 2, %s35
          %s385 = smul.addr %s384, 4
          %s386 = scalar_lea.vmem %s4, %s385
          // Predicated region
          $region79: #{tpu_custom_call.1} parent=77 // pred_check
            _
          $region80: #{tpu_custom_call.1} parent=77 // pred_check_branch
            %388 = sbr.rel (0) target = $region82
          $region81: #{tpu_custom_call.1} parent=77 // pred_region
            // Predicated region
            $region83: #{tpu_custom_call.1} parent=81 // pred_check
              _
            $region84: #{tpu_custom_call.1} parent=81 // pred_check_branch
              %390 = sbr.rel (0) target = $region86
            $region85: #{tpu_custom_call.1} parent=81 // pred_region
              // Predicated region
              $region98: #{tpu_custom_call.1} parent=85 // pred_check
                _
              $region99: #{tpu_custom_call.1} parent=85 // pred_check_branch
                %411 = sbr.rel (0) target = $region101
              $region100: #{tpu_custom_call.1} parent=85 // pred_region
                loop: start=0, step=1, limit=1
                $region102: #{tpu_custom_call.1} parent=100 // loop_pre_header
                  _
                $region103: #{tpu_custom_call.1} parent=100 // loop_header
                  %s413 = sphi 0, %s417
                  %p414 = scmp.ge.s32.totalorder %s413, 1
                  %s418 = sphi %s386, %s386
                  %s419 = sphi %s383, %s383
                $region104: #{tpu_custom_call.1} parent=100 // loop_header_branch
                  %416 = sbr.rel (%p414) target = $region108
                $region105: #{tpu_custom_call.1} parent=100 // loop_body
                  %v420 = vld [vmem:[%s418] sm:$0xff]
                  %421 = vst [vmem:[%s419] sm:$0xff] %v420
                  %v422 = vld [vmem:[%s418 + $0x10] sm:$0xff]
                  %423 = vst [vmem:[%s419 + $0x8] sm:$0xff] %v422
                  %v424 = vld [vmem:[%s418 + $0x20] sm:$0xff]
                  %425 = vst [vmem:[%s419 + $0x10] sm:$0xff] %v424
                  %v426 = vld [vmem:[%s418 + $0x30] sm:$0xff]
                  %427 = vst [vmem:[%s419 + $0x18] sm:$0xff] %v426
                $region106: #{tpu_custom_call.1} parent=100 // loop_footer
                  %s417 = sadd.s32 1, %s413
                $region107: #{tpu_custom_call.1} parent=100 // loop_footer_branch
                  %412 = sbr.rel target = $region103
                $region108: #{tpu_custom_call.1} parent=100 // loop_exit
                  _
              $region101: #{tpu_custom_call.1} parent=85 // pred_fallthru
                _
              // Predicated region
              $region109: #{tpu_custom_call.1} parent=85 // pred_check
                _
              $region110: #{tpu_custom_call.1} parent=85 // pred_check_branch
                %429 = sbr.rel target = $region112
              $region111: #{tpu_custom_call.1} parent=85 // pred_region
                _
              $region112: #{tpu_custom_call.1} parent=85 // pred_fallthru
                _
            $region86: #{tpu_custom_call.1} parent=81 // pred_fallthru
              _
            // Predicated region
            $region87: #{tpu_custom_call.1} parent=81 // pred_check
              _
            $region88: #{tpu_custom_call.1} parent=81 // pred_check_branch
              %392 = sbr.rel target = $region90
            $region89: #{tpu_custom_call.1} parent=81 // pred_region
              loop: start=0, step=1, limit=1
              $region91: #{tpu_custom_call.1} parent=89 // loop_pre_header
                _
              $region92: #{tpu_custom_call.1} parent=89 // loop_header
                %s395 = sphi 0, %s399
                %p396 = scmp.ge.s32.totalorder %s395, 1
                %s400 = sphi %s386, %s386
                %s401 = sphi %s383, %s383
              $region93: #{tpu_custom_call.1} parent=89 // loop_header_branch
                %398 = sbr.rel (%p396) target = $region97
              $region94: #{tpu_custom_call.1} parent=89 // loop_body
                %v402 = vld [vmem:[%s400] sm:$0xff]
                %403 = vst [vmem:[%s401] sm:$0xff] %v402
                %v404 = vld [vmem:[%s400 + $0x10] sm:$0xff]
                %405 = vst [vmem:[%s401 + $0x8] sm:$0xff] %v404
                %v406 = vld [vmem:[%s400 + $0x20] sm:$0xff]
                %407 = vst [vmem:[%s401 + $0x10] sm:$0xff] %v406
                %v408 = vld [vmem:[%s400 + $0x30] sm:$0xff]
                %409 = vst [vmem:[%s401 + $0x18] sm:$0xff] %v408
              $region95: #{tpu_custom_call.1} parent=89 // loop_footer
                %s399 = sadd.s32 1, %s395
              $region96: #{tpu_custom_call.1} parent=89 // loop_footer_branch
                %394 = sbr.rel target = $region92
              $region97: #{tpu_custom_call.1} parent=89 // loop_exit
                _
            $region90: #{tpu_custom_call.1} parent=81 // pred_fallthru
              _
          $region82: #{tpu_custom_call.1} parent=77 // pred_fallthru
            _
          %430 = vnop
        $region78: #{tpu_custom_call.1} parent=31 // pred_fallthru
          _
      $region32: #{tpu_custom_call.1} parent=5 // pred_fallthru
        _
      %p431 = scmp.le.s32.totalorder 1, %s28
      %p432 = scmp.lt.s32.totalorder %s28, 3
      %p433 = pnand %p431, %p432
      %p434 = pneg %p433
      // Predicated region
      $region113: #{tpu_custom_call.1} parent=5 // pred_check
        _
      $region114: #{tpu_custom_call.1} parent=5 // pred_check_branch
        %436 = sbr.rel (%p433) target = $region116
      $region115: #{tpu_custom_call.1} parent=5 // pred_region
        %s437 = ssub.s32 %s28, 1
        %s438 = sand.u32 %s81, 1
        %s439 = sand.u32 %s81, 1
        %s440 = smul.addr %s439, 64
        %s441 = scalar_lea.vmem [#allocation5], %s440
        // Predicated region
        $region117: #{tpu_custom_call.1} parent=115 // pred_check
          %p442 = pneg %p94
        $region118: #{tpu_custom_call.1} parent=115 // pred_check_branch
          %444 = sbr.rel (%p442) target = $region120
        $region119: #{tpu_custom_call.1} parent=115 // pred_region
          _
        $region120: #{tpu_custom_call.1} parent=115 // pred_fallthru
          _
        %s445 = sand.u32 %s107, 1
        %s446 = sand.u32 %s107, 1
        %s447 = smul.addr %s446, 32
        %s448 = scalar_lea.vmem [#allocation6], %s447
        // Predicated region
        $region121: #{tpu_custom_call.1} parent=115 // pred_check
          %p449 = pneg %p120
        $region122: #{tpu_custom_call.1} parent=115 // pred_check_branch
          %451 = sbr.rel (%p449) target = $region124
        $region123: #{tpu_custom_call.1} parent=115 // pred_region
          _
        $region124: #{tpu_custom_call.1} parent=115 // pred_fallthru
          _
        %s452 = smul.u32 2, %s37
        %p453 = scmp.lt.s32.totalorder %s452, 3
        %s454 = scalar_select %p453, %s452, 3
        %s455 = smul.addr %s454, 4
        %s456 = scalar_lea.vmem %s2, %s455
        %p457 = pneg %p66
        %p458 = pneg %p63
        %s459 = sand.u32 %s81, 1
        %s460 = sand.u32 %s81, 1
        %s461 = smul.addr %s460, 64
        %s462 = scalar_lea.vmem [#allocation5], %s461
        %p463 = pneg %p94
        %p464 = pneg %p91
        %s465 = sand.u32 %s107, 1
        %s466 = sand.u32 %s107, 1
        %s467 = smul.addr %s466, 32
        %s468 = scalar_lea.vmem [#allocation6], %s467
        %p469 = pneg %p120
        %p470 = pneg %p117
        %s471 = smul.u32 8, %s38
        %p472 = scmp.lt.s32.totalorder %s471, 7
        %s473 = scalar_select %p472, %s471, 7
        %s474 = smul.addr %s473, 4
        %s475 = smul.addr %s474, 8
        %s476 = scalar_lea.vmem %s5, %s475
        %p477 = pneg %p146
        %p478 = pneg %p143
        %p479 = pneg %p167
        %p480 = pneg %p164
        %s481 = smul.u32 8, %s38
        %p482 = scmp.lt.s32.totalorder %s481, 7
        %s483 = scalar_select %p482, %s481, 7
        %s484 = smul.addr %s483, 4
        %s485 = scalar_lea.vmem %s7, %s484
        %p486 = pneg %p193
        %p487 = pneg %p190
        %s488 = smul.u32 8, %s38
        %p489 = scmp.lt.s32.totalorder %s488, 7
        %s490 = scalar_select %p489, %s488, 7
        %s491 = smul.addr %s490, 4
        %s492 = scalar_lea.vmem %s8, %s491
        %p493 = pneg %p219
        %p494 = pneg %p216
        %p495 = pneg %p245
        %p496 = pneg %p242
        %s497 = sand.u32 %s232, 1
        %s498 = scalar_lea.sflag [#allocation8], %s497
        %s499 = sand.u32 %s232, 1
        %s500 = smul.addr %s499, 8
        %s501 = scalar_lea.vmem [#allocation7], %s500
        %s502 = smul.u32 2, %s37
        %p503 = scmp.lt.s32.totalorder %s502, 3
        %s504 = scalar_select %p503, %s502, 3
        %s505 = smul.addr %s504, 4
        %s506 = scalar_lea.vmem %s2, %s505
        %s507 = smul.u32 2, %s37
        %s508 = smul.u32 8, %s38
        %s509 = smul.u32 2, %s37
        %s510 = smul.u32 2, %s37
        %s511 = smul.u32 8, %s38
        %p512 = scmp.lt.s32.totalorder %s511, 7
        %s513 = scalar_select %p512, %s511, 7
        %s514 = smul.addr %s513, 4
        %s515 = smul.addr %s514, 8
        %s516 = scalar_lea.vmem %s5, %s515
        %s517 = smul.u32 8, %s38
        %s518 = smul.u32 8, %s38
        %p519 = scmp.lt.s32.totalorder %s518, 7
        %s520 = scalar_select %p519, %s518, 7
        %s521 = smul.addr %s520, 4
        %s522 = scalar_lea.vmem %s7, %s521
        %s523 = smul.u32 8, %s38
        %s524 = smul.u32 8, %s38
        %p525 = scmp.lt.s32.totalorder %s524, 7
        %s526 = scalar_select %p525, %s524, 7
        %s527 = smul.addr %s526, 4
        %s528 = scalar_lea.vmem %s8, %s527
        %s529 = smul.u32 8, %s38
        %s530 = smul.u32 2, %s37
        %p531 = scmp.eq.s32.totalorder %s38, 0
        // Predicated region
        $region125: #{tpu_custom_call.1} parent=115 // pred_check
          %p532 = pneg %p531
        $region126: #{tpu_custom_call.1} parent=115 // pred_check_branch
          %534 = sbr.rel (%p532) target = $region128
        $region127: #{tpu_custom_call.1} parent=115 // pred_region
          %v535 = vld [vmem:[%s506] sm:$0xff]
          %536 = vst [vmem:[%s501] sm:$0xff] %v535
        $region128: #{tpu_custom_call.1} parent=115 // pred_fallthru
          _
        %v537 = vld [vmem:[%s448] sm:$0xff]
        %v538 = vld [vmem:[%s448 + $0x8] sm:$0xff]
        %v539 = vld [vmem:[%s448 + $0x10] sm:$0xff]
        %v540 = vld [vmem:[%s448 + $0x18] sm:$0xff]
        %v541 = vunpack.c.l.bf16 %v537
        %v542 = vunpack.c.h.bf16 %v537
        %v543 = vunpack.c.l.bf16 %v538
        %v544 = vunpack.c.h.bf16 %v538
        %v545 = vunpack.c.l.bf16 %v539
        %v546 = vunpack.c.h.bf16 %v539
        %v547 = vunpack.c.l.bf16 %v540
        %v548 = vunpack.c.h.bf16 %v540
        %v549 = vld [vmem:[%s6] sm:$0xff]
        %v550 = vld [vmem:[%s6 + $0x8] sm:$0xff]
        %v551 = vld [vmem:[%s6 + $0x10] sm:$0xff]
        %v552 = vld [vmem:[%s6 + $0x18] sm:$0xff]
        %v553 = vld [vmem:[%s501] sm:$0xff]
        %s554 = smul.u32 %s38, 8
        %v556 = vcombine.high %v553, %v553
        %vm557 = vcmask 31744
        %v559 = vsel %vm557, %v549, 0
        %v562 = vsel %vm557, %v550, 0
        %v565 = vsel %vm557, %v551, 0
        %v568 = vsel %vm557, %v552, 0
        %vm570 = vcmask 1043456
        %v571 = vsel %vm570, %v553, 0
        %v573 = vsel %vm570, %v556, 0
        %575 = vmatprep.subr.mxu0 %v573
        %576 = vmatpush1.msra.mxu0 %v571
        %577 = vmatprep.subr.mxu0 0.0
        %578 = vmatpush1.msra.mxu0 0.0
        %579 = vmatprep.subr.mxu0 0.0
        %580 = vmatpush1.msra.mxu0 0.0
        %581 = vmatprep.subr.mxu0 0.0
        %582 = vmatpush1.msra.mxu0 0.0
        %583 = vmatprep.subr.mxu0 0.0
        %584 = vmatpush1.msra.mxu0 0.0
        %585 = vmatprep.subr.mxu0 0.0
        %586 = vmatpush1.msra.mxu0 0.0
        %587 = vmatprep.subr.mxu0 0.0
        %588 = vmatpush1.msra.mxu0 0.0
        %589 = vmatprep.subr.mxu0 0.0
        %590 = vmatpush1.msra.mxu0 0.0
        %591 = vmatprep.subr.mxu0 0.0
        %592 = vmatpush1.msra.mxu0 0.0
        %593 = vmatprep.subr.mxu0 0.0
        %594 = vmatpush1.msra.mxu0 0.0
        %595 = vmatprep.subr.mxu0 0.0
        %596 = vmatpush1.msra.mxu0 0.0
        %597 = vmatprep.subr.mxu0 0.0
        %598 = vmatpush1.msra.mxu0 0.0
        %599 = vmatprep.subr.mxu0 0.0
        %600 = vmatpush1.msra.mxu0 0.0
        %601 = vmatprep.subr.mxu0 0.0
        %602 = vmatpush1.msra.mxu0 0.0
        %603 = vmatprep.subr.mxu0 0.0
        %604 = vmatpush1.msra.mxu0 0.0
        %605 = vmatprep.subr.mxu0 0.0
        %606 = vmatpush1.msra.mxu0 0.0
        %607 = vmatprep.subr.mxu0 0.0
        %608 = vmatpush1.msra.mxu0 0.0
        %609 = vmatprep.subr.mxu0 0.0
        %610 = vmatpush1.msra.mxu0 0.0
        %611 = vmatprep.subr.mxu0 0.0
        %612 = vmatpush1.msra.mxu0 0.0
        %613 = vmatprep.subr.mxu0 0.0
        %614 = vmatpush1.msra.mxu0 0.0
        %615 = vmatprep.subr.mxu0 0.0
        %616 = vmatpush1.msra.mxu0 0.0
        %617 = vmatprep.subr.mxu0 0.0
        %618 = vmatpush1.msra.mxu0 0.0
        %619 = vmatprep.subr.mxu0 0.0
        %620 = vmatpush1.msra.mxu0 0.0
        %621 = vmatprep.subr.mxu0 0.0
        %622 = vmatpush1.msra.mxu0 0.0
        %623 = vmatprep.subr.mxu0 0.0
        %624 = vmatpush1.msra.mxu0 0.0
        %625 = vmatprep.subr.mxu0 0.0
        %626 = vmatpush1.msra.mxu0 0.0
        %627 = vmatprep.subr.mxu0 0.0
        %628 = vmatpush1.msra.mxu0 0.0
        %629 = vmatprep.subr.mxu0 0.0
        %630 = vmatpush1.msra.mxu0 0.0
        %631 = vmatprep.subr.mxu0 0.0
        %632 = vmatpush1.msra.mxu0 0.0
        %633 = vmatprep.subr.mxu0 0.0
        %634 = vmatpush1.msra.mxu0 0.0
        %635 = vmatprep.subr.mxu0 0.0
        %636 = vmatpush1.msra.mxu0 0.0
        %637 = vmatprep.subr.mxu0 0.0
        %638 = vmatpush1.msra.mxu0 0.0
        %639 = vmatprep.mubr.f32.mxu0 0.0
        %640 = vmatmul.mubr.f32.gmra.mrb[0].mxu0 %v559
        %v641 = vpop.f32.mrb[0].mxu0
        %v642 = vadd.f32 %v541, %v641
        %v643 = vpop.f32.mrb[0].mxu0
        %v644 = vadd.f32 %v542, %v643
        %645 = vmatprep.mubr.f32.mxu0 0.0
        %646 = vmatmul.mubr.f32.gmra.mrb[0].mxu0 %v562
        %v647 = vpop.f32.mrb[0].mxu0
        %v648 = vadd.f32 %v543, %v647
        %v649 = vpop.f32.mrb[0].mxu0
        %v650 = vadd.f32 %v544, %v649
        %651 = vmatprep.mubr.f32.mxu0 0.0
        %652 = vmatmul.mubr.f32.gmra.mrb[0].mxu0 %v565
        %v653 = vpop.f32.mrb[0].mxu0
        %v654 = vadd.f32 %v545, %v653
        %v655 = vpop.f32.mrb[0].mxu0
        %v656 = vadd.f32 %v546, %v655
        %657 = vmatprep.mubr.f32.mxu0 0.0
        %658 = vmatmul.mubr.f32.gmra.mrb[0].mxu0 %v568
        %v659 = vpop.f32.mrb[0].mxu0
        %v660 = vadd.f32 %v547, %v659
        %v661 = vpop.f32.mrb[0].mxu0
        %v662 = vadd.f32 %v548, %v661
        %663 = vdwg.mxu0
        %v664 = vld [vmem:[%s516] sm:$0xff]
        %v665 = vld [vmem:[%s516 + $0x8] sm:$0xff]
        %v666 = vld [vmem:[%s516 + $0x10] sm:$0xff]
        %v667 = vld [vmem:[%s516 + $0x18] sm:$0xff]
        %669 = vset.pattern.permute.xlu0 0
        %670 = vperm.xlu0 %669, %v664
        %v671 = vpop.permute.xlu0 %670
        %674 = vset.pattern.permute.xlu0 0
        %675 = vperm.xlu0 %674, %v665
        %v676 = vpop.permute.xlu0 %675
        %679 = vset.pattern.permute.xlu0 0
        %680 = vperm.xlu0 %679, %v666
        %v681 = vpop.permute.xlu0 %680
        %684 = vset.pattern.permute.xlu0 0
        %685 = vperm.xlu0 %684, %v667
        %v686 = vpop.permute.xlu0 %685
        %v688 = vadd.f32 %v642, %v671
        %v689 = vadd.f32 %v644, %v671
        %v690 = vadd.f32 %v648, %v676
        %v691 = vadd.f32 %v650, %v676
        %v692 = vadd.f32 %v654, %v681
        %v693 = vadd.f32 %v656, %v681
        %v694 = vadd.f32 %v660, %v686
        %v695 = vadd.f32 %v662, %v686
        %v696 = vmax.f32 %v688, 0.0
        %v697 = vmax.f32 %v689, 0.0
        %v698 = vmax.f32 %v690, 0.0
        %v699 = vmax.f32 %v691, 0.0
        %v700 = vmax.f32 %v692, 0.0
        %v701 = vmax.f32 %v693, 0.0
        %v702 = vmax.f32 %v694, 0.0
        %v703 = vmax.f32 %v695, 0.0
        %v704 = vld [vmem:[%s522] sm:$0xf]
        %v705 = vld [vmem:[%s528] sm:$0xf]
        %707 = vset.pattern.permute.xlu0 0
        %708 = vperm.xlu0 %707, %v705
        %v709 = vpop.permute.xlu0 %708
        %vm711 = vcmask 261120
        %v713 = vsel %vm711, %v704, 0
        %715 = vmatprep.subr.mxu0 %v697
        %716 = vmatpush1.msra.mxu0 %v696
        %717 = vmatprep.subr.mxu0 %v699
        %718 = vmatpush1.msra.mxu0 %v698
        %719 = vmatprep.subr.mxu0 %v701
        %720 = vmatpush1.msra.mxu0 %v700
        %721 = vmatprep.subr.mxu0 %v703
        %722 = vmatpush1.msra.mxu0 %v702
        %723 = vmatprep.subr.mxu0 0.0
        %724 = vmatpush1.msra.mxu0 0.0
        %725 = vmatprep.subr.mxu0 0.0
        %726 = vmatpush1.msra.mxu0 0.0
        %727 = vmatprep.subr.mxu0 0.0
        %728 = vmatpush1.msra.mxu0 0.0
        %729 = vmatprep.subr.mxu0 0.0
        %730 = vmatpush1.msra.mxu0 0.0
        %731 = vmatprep.subr.mxu0 0.0
        %732 = vmatpush1.msra.mxu0 0.0
        %733 = vmatprep.subr.mxu0 0.0
        %734 = vmatpush1.msra.mxu0 0.0
        %735 = vmatprep.subr.mxu0 0.0
        %736 = vmatpush1.msra.mxu0 0.0
        %737 = vmatprep.subr.mxu0 0.0
        %738 = vmatpush1.msra.mxu0 0.0
        %739 = vmatprep.subr.mxu0 0.0
        %740 = vmatpush1.msra.mxu0 0.0
        %741 = vmatprep.subr.mxu0 0.0
        %742 = vmatpush1.msra.mxu0 0.0
        %743 = vmatprep.subr.mxu0 0.0
        %744 = vmatpush1.msra.mxu0 0.0
        %745 = vmatprep.subr.mxu0 0.0
        %746 = vmatpush1.msra.mxu0 0.0
        %747 = vmatprep.subr.mxu0 0.0
        %748 = vmatpush1.msra.mxu0 0.0
        %749 = vmatprep.subr.mxu0 0.0
        %750 = vmatpush1.msra.mxu0 0.0
        %751 = vmatprep.subr.mxu0 0.0
        %752 = vmatpush1.msra.mxu0 0.0
        %753 = vmatprep.subr.mxu0 0.0
        %754 = vmatpush1.msra.mxu0 0.0
        %755 = vmatprep.subr.mxu0 0.0
        %756 = vmatpush1.msra.mxu0 0.0
        %757 = vmatprep.subr.mxu0 0.0
        %758 = vmatpush1.msra.mxu0 0.0
        %759 = vmatprep.subr.mxu0 0.0
        %760 = vmatpush1.msra.mxu0 0.0
        %761 = vmatprep.subr.mxu0 0.0
        %762 = vmatpush1.msra.mxu0 0.0
        %763 = vmatprep.subr.mxu0 0.0
        %764 = vmatpush1.msra.mxu0 0.0
        %765 = vmatprep.subr.mxu0 0.0
        %766 = vmatpush1.msra.mxu0 0.0
        %767 = vmatprep.subr.mxu0 0.0
        %768 = vmatpush1.msra.mxu0 0.0
        %769 = vmatprep.subr.mxu0 0.0
        %770 = vmatpush1.msra.mxu0 0.0
        %771 = vmatprep.subr.mxu0 0.0
        %772 = vmatpush1.msra.mxu0 0.0
        %773 = vmatprep.subr.mxu0 0.0
        %774 = vmatpush1.msra.mxu0 0.0
        %775 = vmatprep.subr.mxu0 0.0
        %776 = vmatpush1.msra.mxu0 0.0
        %777 = vmatprep.subr.mxu0 0.0
        %778 = vmatpush1.msra.mxu0 0.0
        %779 = vmatprep.mubr.f32.mxu0 0.0
        %780 = vmatmul.mubr.f32.gmra.mrb[0].mxu0 %v713
        %v781 = vpop.f32.mrb[0].mxu0
        %v782 = vadd.f32 %v709, %v781
        %v783 = vpop.f32.mrb[0].mxu0
        %v784 = vadd.f32 %v709, %v783
        %785 = vdwg.mxu0
        %s786 = sld [smem:[#allocation3 + %s554]]
        %p787 = scmp.eq.s32.totalorder %s554, 7
        %s788 = sld [smem:[#allocation4 + %s554]]
        %s789 = scalar_select %p787, 0.0, %s788
        %v790 = vstv %s786
        %v791 = vmul.f32 %v790, %v553
        %v794 = vcombine.low %v782, %v784
        %v796 = vadd.f32 %v791, %v794
        %v797 = vld [vmem:[%s441] sm:$0xff]
        %v798 = vstv %s789
        %v799 = vmul.f32 %v798, %v797
        %v800 = vadd.f32 %v796, %v799
        %s801 = sadd.s32 %s554, 1
        %v803 = vcombine.high %v800, %v800
        %v804 = vsel %vm570, %v800, 0
        %v806 = vsel %vm570, %v803, 0
        %808 = vmatprep.subr.mxu0 %v806
        %809 = vmatpush1.msra.mxu0 %v804
        %810 = vmatprep.subr.mxu0 0.0
        %811 = vmatpush1.msra.mxu0 0.0
        %812 = vmatprep.subr.mxu0 0.0
        %813 = vmatpush1.msra.mxu0 0.0
        %814 = vmatprep.subr.mxu0 0.0
        %815 = vmatpush1.msra.mxu0 0.0
        %816 = vmatprep.subr.mxu0 0.0
        %817 = vmatpush1.msra.mxu0 0.0
        %818 = vmatprep.subr.mxu0 0.0
        %819 = vmatpush1.msra.mxu0 0.0
        %820 = vmatprep.subr.mxu0 0.0
        %821 = vmatpush1.msra.mxu0 0.0
        %822 = vmatprep.subr.mxu0 0.0
        %823 = vmatpush1.msra.mxu0 0.0
        %824 = vmatprep.subr.mxu0 0.0
        %825 = vmatpush1.msra.mxu0 0.0
        %826 = vmatprep.subr.mxu0 0.0
        %827 = vmatpush1.msra.mxu0 0.0
        %828 = vmatprep.subr.mxu0 0.0
        %829 = vmatpush1.msra.mxu0 0.0
        %830 = vmatprep.subr.mxu0 0.0
        %831 = vmatpush1.msra.mxu0 0.0
        %832 = vmatprep.subr.mxu0 0.0
        %833 = vmatpush1.msra.mxu0 0.0
        %834 = vmatprep.subr.mxu0 0.0
        %835 = vmatpush1.msra.mxu0 0.0
        %836 = vmatprep.subr.mxu0 0.0
        %837 = vmatpush1.msra.mxu0 0.0
        %838 = vmatprep.subr.mxu0 0.0
        %839 = vmatpush1.msra.mxu0 0.0
        %840 = vmatprep.subr.mxu0 0.0
        %841 = vmatpush1.msra.mxu0 0.0
        %842 = vmatprep.subr.mxu0 0.0
        %843 = vmatpush1.msra.mxu0 0.0
        %844 = vmatprep.subr.mxu0 0.0
        %845 = vmatpush1.msra.mxu0 0.0
        %846 = vmatprep.subr.mxu0 0.0
        %847 = vmatpush1.msra.mxu0 0.0
        %848 = vmatprep.subr.mxu0 0.0
        %849 = vmatpush1.msra.mxu0 0.0
        %850 = vmatprep.subr.mxu0 0.0
        %851 = vmatpush1.msra.mxu0 0.0
        %852 = vmatprep.subr.mxu0 0.0
        %853 = vmatpush1.msra.mxu0 0.0
        %854 = vmatprep.subr.mxu0 0.0
        %855 = vmatpush1.msra.mxu0 0.0
        %856 = vmatprep.subr.mxu0 0.0
        %857 = vmatpush1.msra.mxu0 0.0
        %858 = vmatprep.subr.mxu0 0.0
        %859 = vmatpush1.msra.mxu0 0.0
        %860 = vmatprep.subr.mxu0 0.0
        %861 = vmatpush1.msra.mxu0 0.0
        %862 = vmatprep.subr.mxu0 0.0
        %863 = vmatpush1.msra.mxu0 0.0
        %864 = vmatprep.subr.mxu0 0.0
        %865 = vmatpush1.msra.mxu0 0.0
        %866 = vmatprep.subr.mxu0 0.0
        %867 = vmatpush1.msra.mxu0 0.0
        %868 = vmatprep.subr.mxu0 0.0
        %869 = vmatpush1.msra.mxu0 0.0
        %870 = vmatprep.subr.mxu0 0.0
        %871 = vmatpush1.msra.mxu0 0.0
        %872 = vmatprep.mubr.f32.mxu0 0.0
        %873 = vmatmul.mubr.f32.gmra.mrb[0].mxu0 %v559
        %v874 = vpop.f32.mrb[0].mxu0
        %v875 = vadd.f32 %v541, %v874
        %v876 = vpop.f32.mrb[0].mxu0
        %v877 = vadd.f32 %v542, %v876
        %878 = vmatprep.mubr.f32.mxu0 0.0
        %879 = vmatmul.mubr.f32.gmra.mrb[0].mxu0 %v562
        %v880 = vpop.f32.mrb[0].mxu0
        %v881 = vadd.f32 %v543, %v880
        %v882 = vpop.f32.mrb[0].mxu0
        %v883 = vadd.f32 %v544, %v882
        %884 = vmatprep.mubr.f32.mxu0 0.0
        %885 = vmatmul.mubr.f32.gmra.mrb[0].mxu0 %v565
        %v886 = vpop.f32.mrb[0].mxu0
        %v887 = vadd.f32 %v545, %v886
        %v888 = vpop.f32.mrb[0].mxu0
        %v889 = vadd.f32 %v546, %v888
        %890 = vmatprep.mubr.f32.mxu0 0.0
        %891 = vmatmul.mubr.f32.gmra.mrb[0].mxu0 %v568
        %v892 = vpop.f32.mrb[0].mxu0
        %v893 = vadd.f32 %v547, %v892
        %v894 = vpop.f32.mrb[0].mxu0
        %v895 = vadd.f32 %v548, %v894
        %896 = vdwg.mxu0
        %s897 = scalar_lea.vmem %s516, 32
        %v898 = vld [vmem:[%s897] sm:$0xff]
        %v899 = vld [vmem:[%s897 + $0x8] sm:$0xff]
        %v900 = vld [vmem:[%s897 + $0x10] sm:$0xff]
        %v901 = vld [vmem:[%s897 + $0x18] sm:$0xff]
        %903 = vset.pattern.permute.xlu0 0
        %904 = vperm.xlu0 %903, %v898
        %v905 = vpop.permute.xlu0 %904
        %908 = vset.pattern.permute.xlu0 0
        %909 = vperm.xlu0 %908, %v899
        %v910 = vpop.permute.xlu0 %909
        %913 = vset.pattern.permute.xlu0 0
        %914 = vperm.xlu0 %913, %v900
        %v915 = vpop.permute.xlu0 %914
        %918 = vset.pattern.permute.xlu0 0
        %919 = vperm.xlu0 %918, %v901
        %v920 = vpop.permute.xlu0 %919
        %v922 = vadd.f32 %v875, %v905
        %v923 = vadd.f32 %v877, %v905
        %v924 = vadd.f32 %v881, %v910
        %v925 = vadd.f32 %v883, %v910
        %v926 = vadd.f32 %v887, %v915
        %v927 = vadd.f32 %v889, %v915
        %v928 = vadd.f32 %v893, %v920
        %v929 = vadd.f32 %v895, %v920
        %v930 = vmax.f32 %v922, 0.0
        %v931 = vmax.f32 %v923, 0.0
        %v932 = vmax.f32 %v924, 0.0
        %v933 = vmax.f32 %v925, 0.0
        %v934 = vmax.f32 %v926, 0.0
        %v935 = vmax.f32 %v927, 0.0
        %v936 = vmax.f32 %v928, 0.0
        %v937 = vmax.f32 %v929, 0.0
        %s938 = scalar_lea.vmem %s522, 4
        %v939 = vld [vmem:[%s938] sm:$0xf]
        %s940 = scalar_lea.vmem %s528, 4
        %v941 = vld [vmem:[%s940] sm:$0xf]
        %943 = vset.pattern.permute.xlu0 0
        %944 = vperm.xlu0 %943, %v941
        %v945 = vpop.permute.xlu0 %944
        %v948 = vsel %vm711, %v939, 0
        %950 = vmatprep.subr.mxu0 %v931
        %951 = vmatpush1.msra.mxu0 %v930
        %952 = vmatprep.subr.mxu0 %v933
        %953 = vmatpush1.msra.mxu0 %v932
        %954 = vmatprep.subr.mxu0 %v935
        %955 = vmatpush1.msra.mxu0 %v934
        %956 = vmatprep.subr.mxu0 %v937
        %957 = vmatpush1.msra.mxu0 %v936
        %958 = vmatprep.subr.mxu0 0.0
        %959 = vmatpush1.msra.mxu0 0.0
        %960 = vmatprep.subr.mxu0 0.0
        %961 = vmatpush1.msra.mxu0 0.0
        %962 = vmatprep.subr.mxu0 0.0
        %963 = vmatpush1.msra.mxu0 0.0
        %964 = vmatprep.subr.mxu0 0.0
        %965 = vmatpush1.msra.mxu0 0.0
        %966 = vmatprep.subr.mxu0 0.0
        %967 = vmatpush1.msra.mxu0 0.0
        %968 = vmatprep.subr.mxu0 0.0
        %969 = vmatpush1.msra.mxu0 0.0
        %970 = vmatprep.subr.mxu0 0.0
        %971 = vmatpush1.msra.mxu0 0.0
        %972 = vmatprep.subr.mxu0 0.0
        %973 = vmatpush1.msra.mxu0 0.0
        %974 = vmatprep.subr.mxu0 0.0
        %975 = vmatpush1.msra.mxu0 0.0
        %976 = vmatprep.subr.mxu0 0.0
        %977 = vmatpush1.msra.mxu0 0.0
        %978 = vmatprep.subr.mxu0 0.0
        %979 = vmatpush1.msra.mxu0 0.0
        %980 = vmatprep.subr.mxu0 0.0
        %981 = vmatpush1.msra.mxu0 0.0
        %982 = vmatprep.subr.mxu0 0.0
        %983 = vmatpush1.msra.mxu0 0.0
        %984 = vmatprep.subr.mxu0 0.0
        %985 = vmatpush1.msra.mxu0 0.0
        %986 = vmatprep.subr.mxu0 0.0
        %987 = vmatpush1.msra.mxu0 0.0
        %988 = vmatprep.subr.mxu0 0.0
        %989 = vmatpush1.msra.mxu0 0.0
        %990 = vmatprep.subr.mxu0 0.0
        %991 = vmatpush1.msra.mxu0 0.0
        %992 = vmatprep.subr.mxu0 0.0
        %993 = vmatpush1.msra.mxu0 0.0
        %994 = vmatprep.subr.mxu0 0.0
        %995 = vmatpush1.msra.mxu0 0.0
        %996 = vmatprep.subr.mxu0 0.0
        %997 = vmatpush1.msra.mxu0 0.0
        %998 = vmatprep.subr.mxu0 0.0
        %999 = vmatpush1.msra.mxu0 0.0
        %1000 = vmatprep.subr.mxu0 0.0
        %1001 = vmatpush1.msra.mxu0 0.0
        %1002 = vmatprep.subr.mxu0 0.0
        %1003 = vmatpush1.msra.mxu0 0.0
        %1004 = vmatprep.subr.mxu0 0.0
        %1005 = vmatpush1.msra.mxu0 0.0
        %1006 = vmatprep.subr.mxu0 0.0
        %1007 = vmatpush1.msra.mxu0 0.0
        %1008 = vmatprep.subr.mxu0 0.0
        %1009 = vmatpush1.msra.mxu0 0.0
        %1010 = vmatprep.subr.mxu0 0.0
        %1011 = vmatpush1.msra.mxu0 0.0
        %1012 = vmatprep.subr.mxu0 0.0
        %1013 = vmatpush1.msra.mxu0 0.0
        %1014 = vmatprep.mubr.f32.mxu0 0.0
        %1015 = vmatmul.mubr.f32.gmra.mrb[0].mxu0 %v948
        %v1016 = vpop.f32.mrb[0].mxu0
        %v1017 = vadd.f32 %v945, %v1016
        %v1018 = vpop.f32.mrb[0].mxu0
        %v1019 = vadd.f32 %v945, %v1018
        %1020 = vdwg.mxu0
        %s1021 = sld [smem:[#allocation3 + %s801]]
        %p1022 = scmp.eq.s32.totalorder %s801, 7
        %s1023 = sld [smem:[#allocation4 + %s801]]
        %s1024 = scalar_select %p1022, 0.0, %s1023
        %v1025 = vstv %s1021
        %v1026 = vmul.f32 %v1025, %v800
        %v1029 = vcombine.low %v1017, %v1019
        %v1031 = vadd.f32 %v1026, %v1029
        %s1032 = scalar_lea.vmem %s441, 8 [#allocation5]
        %v1033 = vld [vmem:[%s1032] sm:$0xff]
        %v1034 = vstv %s1024
        %v1035 = vmul.f32 %v1034, %v1033
        %v1036 = vadd.f32 %v1031, %v1035
        %s1037 = sadd.s32 %s554, 2
        %v1039 = vcombine.high %v1036, %v1036
        %v1040 = vsel %vm570, %v1036, 0
        %v1042 = vsel %vm570, %v1039, 0
        %1044 = vmatprep.subr.mxu0 %v1042
        %1045 = vmatpush1.msra.mxu0 %v1040
        %1046 = vmatprep.subr.mxu0 0.0
        %1047 = vmatpush1.msra.mxu0 0.0
        %1048 = vmatprep.subr.mxu0 0.0
        %1049 = vmatpush1.msra.mxu0 0.0
        %1050 = vmatprep.subr.mxu0 0.0
        %1051 = vmatpush1.msra.mxu0 0.0
        %1052 = vmatprep.subr.mxu0 0.0
        %1053 = vmatpush1.msra.mxu0 0.0
        %1054 = vmatprep.subr.mxu0 0.0
        %1055 = vmatpush1.msra.mxu0 0.0
        %1056 = vmatprep.subr.mxu0 0.0
        %1057 = vmatpush1.msra.mxu0 0.0
        %1058 = vmatprep.subr.mxu0 0.0
        %1059 = vmatpush1.msra.mxu0 0.0
        %1060 = vmatprep.subr.mxu0 0.0
        %1061 = vmatpush1.msra.mxu0 0.0
        %1062 = vmatprep.subr.mxu0 0.0
        %1063 = vmatpush1.msra.mxu0 0.0
        %1064 = vmatprep.subr.mxu0 0.0
        %1065 = vmatpush1.msra.mxu0 0.0
        %1066 = vmatprep.subr.mxu0 0.0
        %1067 = vmatpush1.msra.mxu0 0.0
        %1068 = vmatprep.subr.mxu0 0.0
        %1069 = vmatpush1.msra.mxu0 0.0
        %1070 = vmatprep.subr.mxu0 0.0
        %1071 = vmatpush1.msra.mxu0 0.0
        %1072 = vmatprep.subr.mxu0 0.0
        %1073 = vmatpush1.msra.mxu0 0.0
        %1074 = vmatprep.subr.mxu0 0.0
        %1075 = vmatpush1.msra.mxu0 0.0
        %1076 = vmatprep.subr.mxu0 0.0
        %1077 = vmatpush1.msra.mxu0 0.0
        %1078 = vmatprep.subr.mxu0 0.0
        %1079 = vmatpush1.msra.mxu0 0.0
        %1080 = vmatprep.subr.mxu0 0.0
        %1081 = vmatpush1.msra.mxu0 0.0
        %1082 = vmatprep.subr.mxu0 0.0
        %1083 = vmatpush1.msra.mxu0 0.0
        %1084 = vmatprep.subr.mxu0 0.0
        %1085 = vmatpush1.msra.mxu0 0.0
        %1086 = vmatprep.subr.mxu0 0.0
        %1087 = vmatpush1.msra.mxu0 0.0
        %1088 = vmatprep.subr.mxu0 0.0
        %1089 = vmatpush1.msra.mxu0 0.0
        %1090 = vmatprep.subr.mxu0 0.0
        %1091 = vmatpush1.msra.mxu0 0.0
        %1092 = vmatprep.subr.mxu0 0.0
        %1093 = vmatpush1.msra.mxu0 0.0
        %1094 = vmatprep.subr.mxu0 0.0
        %1095 = vmatpush1.msra.mxu0 0.0
        %1096 = vmatprep.subr.mxu0 0.0
        %1097 = vmatpush1.msra.mxu0 0.0
        %1098 = vmatprep.subr.mxu0 0.0
        %1099 = vmatpush1.msra.mxu0 0.0
        %1100 = vmatprep.subr.mxu0 0.0
        %1101 = vmatpush1.msra.mxu0 0.0
        %1102 = vmatprep.subr.mxu0 0.0
        %1103 = vmatpush1.msra.mxu0 0.0
        %1104 = vmatprep.subr.mxu0 0.0
        %1105 = vmatpush1.msra.mxu0 0.0
        %1106 = vmatprep.subr.mxu0 0.0
        %1107 = vmatpush1.msra.mxu0 0.0
        %1108 = vmatprep.mubr.f32.mxu0 0.0
        %1109 = vmatmul.mubr.f32.gmra.mrb[0].mxu0 %v559
        %v1110 = vpop.f32.mrb[0].mxu0
        %v1111 = vadd.f32 %v541, %v1110
        %v1112 = vpop.f32.mrb[0].mxu0
        %v1113 = vadd.f32 %v542, %v1112
        %1114 = vmatprep.mubr.f32.mxu0 0.0
        %1115 = vmatmul.mubr.f32.gmra.mrb[0].mxu0 %v562
        %v1116 = vpop.f32.mrb[0].mxu0
        %v1117 = vadd.f32 %v543, %v1116
        %v1118 = vpop.f32.mrb[0].mxu0
        %v1119 = vadd.f32 %v544, %v1118
        %1120 = vmatprep.mubr.f32.mxu0 0.0
        %1121 = vmatmul.mubr.f32.gmra.mrb[0].mxu0 %v565
        %v1122 = vpop.f32.mrb[0].mxu0
        %v1123 = vadd.f32 %v545, %v1122
        %v1124 = vpop.f32.mrb[0].mxu0
        %v1125 = vadd.f32 %v546, %v1124
        %1126 = vmatprep.mubr.f32.mxu0 0.0
        %1127 = vmatmul.mubr.f32.gmra.mrb[0].mxu0 %v568
        %v1128 = vpop.f32.mrb[0].mxu0
        %v1129 = vadd.f32 %v547, %v1128
        %v1130 = vpop.f32.mrb[0].mxu0
        %v1131 = vadd.f32 %v548, %v1130
        %1132 = vdwg.mxu0
        %s1133 = scalar_lea.vmem %s516, 64
        %v1134 = vld [vmem:[%s1133] sm:$0xff]
        %v1135 = vld [vmem:[%s1133 + $0x8] sm:$0xff]
        %v1136 = vld [vmem:[%s1133 + $0x10] sm:$0xff]
        %v1137 = vld [vmem:[%s1133 + $0x18] sm:$0xff]
        %1139 = vset.pattern.permute.xlu0 0
        %1140 = vperm.xlu0 %1139, %v1134
        %v1141 = vpop.permute.xlu0 %1140
        %1144 = vset.pattern.permute.xlu0 0
        %1145 = vperm.xlu0 %1144, %v1135
        %v1146 = vpop.permute.xlu0 %1145
        %1149 = vset.pattern.permute.xlu0 0
        %1150 = vperm.xlu0 %1149, %v1136
        %v1151 = vpop.permute.xlu0 %1150
        %1154 = vset.pattern.permute.xlu0 0
        %1155 = vperm.xlu0 %1154, %v1137
        %v1156 = vpop.permute.xlu0 %1155
        %v1158 = vadd.f32 %v1111, %v1141
        %v1159 = vadd.f32 %v1113, %v1141
        %v1160 = vadd.f32 %v1117, %v1146
        %v1161 = vadd.f32 %v1119, %v1146
        %v1162 = vadd.f32 %v1123, %v1151
        %v1163 = vadd.f32 %v1125, %v1151
        %v1164 = vadd.f32 %v1129, %v1156
        %v1165 = vadd.f32 %v1131, %v1156
        %v1166 = vmax.f32 %v1158, 0.0
        %v1167 = vmax.f32 %v1159, 0.0
        %v1168 = vmax.f32 %v1160, 0.0
        %v1169 = vmax.f32 %v1161, 0.0
        %v1170 = vmax.f32 %v1162, 0.0
        %v1171 = vmax.f32 %v1163, 0.0
        %v1172 = vmax.f32 %v1164, 0.0
        %v1173 = vmax.f32 %v1165, 0.0
        %s1174 = scalar_lea.vmem %s522, 8
        %v1175 = vld [vmem:[%s1174] sm:$0xf]
        %s1176 = scalar_lea.vmem %s528, 8
        %v1177 = vld [vmem:[%s1176] sm:$0xf]
        %1179 = vset.pattern.permute.xlu0 0
        %1180 = vperm.xlu0 %1179, %v1177
        %v1181 = vpop.permute.xlu0 %1180
        %v1184 = vsel %vm711, %v1175, 0
        %1186 = vmatprep.subr.mxu0 %v1167
        %1187 = vmatpush1.msra.mxu0 %v1166
        %1188 = vmatprep.subr.mxu0 %v1169
        %1189 = vmatpush1.msra.mxu0 %v1168
        %1190 = vmatprep.subr.mxu0 %v1171
        %1191 = vmatpush1.msra.mxu0 %v1170
        %1192 = vmatprep.subr.mxu0 %v1173
        %1193 = vmatpush1.msra.mxu0 %v1172
        %1194 = vmatprep.subr.mxu0 0.0
        %1195 = vmatpush1.msra.mxu0 0.0
        %1196 = vmatprep.subr.mxu0 0.0
        %1197 = vmatpush1.msra.mxu0 0.0
        %1198 = vmatprep.subr.mxu0 0.0
        %1199 = vmatpush1.msra.mxu0 0.0
        %1200 = vmatprep.subr.mxu0 0.0
        %1201 = vmatpush1.msra.mxu0 0.0
        %1202 = vmatprep.subr.mxu0 0.0
        %1203 = vmatpush1.msra.mxu0 0.0
        %1204 = vmatprep.subr.mxu0 0.0
        %1205 = vmatpush1.msra.mxu0 0.0
        %1206 = vmatprep.subr.mxu0 0.0
        %1207 = vmatpush1.msra.mxu0 0.0
        %1208 = vmatprep.subr.mxu0 0.0
        %1209 = vmatpush1.msra.mxu0 0.0
        %1210 = vmatprep.subr.mxu0 0.0
        %1211 = vmatpush1.msra.mxu0 0.0
        %1212 = vmatprep.subr.mxu0 0.0
        %1213 = vmatpush1.msra.mxu0 0.0
        %1214 = vmatprep.subr.mxu0 0.0
        %1215 = vmatpush1.msra.mxu0 0.0
        %1216 = vmatprep.subr.mxu0 0.0
        %1217 = vmatpush1.msra.mxu0 0.0
        %1218 = vmatprep.subr.mxu0 0.0
        %1219 = vmatpush1.msra.mxu0 0.0
        %1220 = vmatprep.subr.mxu0 0.0
        %1221 = vmatpush1.msra.mxu0 0.0
        %1222 = vmatprep.subr.mxu0 0.0
        %1223 = vmatpush1.msra.mxu0 0.0
        %1224 = vmatprep.subr.mxu0 0.0
        %1225 = vmatpush1.msra.mxu0 0.0
        %1226 = vmatprep.subr.mxu0 0.0
        %1227 = vmatpush1.msra.mxu0 0.0
        %1228 = vmatprep.subr.mxu0 0.0
        %1229 = vmatpush1.msra.mxu0 0.0
        %1230 = vmatprep.subr.mxu0 0.0
        %1231 = vmatpush1.msra.mxu0 0.0
        %1232 = vmatprep.subr.mxu0 0.0
        %1233 = vmatpush1.msra.mxu0 0.0
        %1234 = vmatprep.subr.mxu0 0.0
        %1235 = vmatpush1.msra.mxu0 0.0
        %1236 = vmatprep.subr.mxu0 0.0
        %1237 = vmatpush1.msra.mxu0 0.0
        %1238 = vmatprep.subr.mxu0 0.0
        %1239 = vmatpush1.msra.mxu0 0.0
        %1240 = vmatprep.subr.mxu0 0.0
        %1241 = vmatpush1.msra.mxu0 0.0
        %1242 = vmatprep.subr.mxu0 0.0
        %1243 = vmatpush1.msra.mxu0 0.0
        %1244 = vmatprep.subr.mxu0 0.0
        %1245 = vmatpush1.msra.mxu0 0.0
        %1246 = vmatprep.subr.mxu0 0.0
        %1247 = vmatpush1.msra.mxu0 0.0
        %1248 = vmatprep.subr.mxu0 0.0
        %1249 = vmatpush1.msra.mxu0 0.0
        %1250 = vmatprep.mubr.f32.mxu0 0.0
        %1251 = vmatmul.mubr.f32.gmra.mrb[0].mxu0 %v1184
        %v1252 = vpop.f32.mrb[0].mxu0
        %v1253 = vadd.f32 %v1181, %v1252
        %v1254 = vpop.f32.mrb[0].mxu0
        %v1255 = vadd.f32 %v1181, %v1254
        %1256 = vdwg.mxu0
        %s1257 = sld [smem:[#allocation3 + %s1037]]
        %p1258 = scmp.eq.s32.totalorder %s1037, 7
        %s1259 = sld [smem:[#allocation4 + %s1037]]
        %s1260 = scalar_select %p1258, 0.0, %s1259
        %v1261 = vstv %s1257
        %v1262 = vmul.f32 %v1261, %v1036
        %v1265 = vcombine.low %v1253, %v1255
        %v1267 = vadd.f32 %v1262, %v1265
        %s1268 = scalar_lea.vmem %s441, 16 [#allocation5]
        %v1269 = vld [vmem:[%s1268] sm:$0xff]
        %v1270 = vstv %s1260
        %v1271 = vmul.f32 %v1270, %v1269
        %v1272 = vadd.f32 %v1267, %v1271
        %s1273 = sadd.s32 %s554, 3
        %v1275 = vcombine.high %v1272, %v1272
        %v1276 = vsel %vm570, %v1272, 0
        %v1278 = vsel %vm570, %v1275, 0
        %1280 = vmatprep.subr.mxu0 %v1278
        %1281 = vmatpush1.msra.mxu0 %v1276
        %1282 = vmatprep.subr.mxu0 0.0
        %1283 = vmatpush1.msra.mxu0 0.0
        %1284 = vmatprep.subr.mxu0 0.0
        %1285 = vmatpush1.msra.mxu0 0.0
        %1286 = vmatprep.subr.mxu0 0.0
        %1287 = vmatpush1.msra.mxu0 0.0
        %1288 = vmatprep.subr.mxu0 0.0
        %1289 = vmatpush1.msra.mxu0 0.0
        %1290 = vmatprep.subr.mxu0 0.0
        %1291 = vmatpush1.msra.mxu0 0.0
        %1292 = vmatprep.subr.mxu0 0.0
        %1293 = vmatpush1.msra.mxu0 0.0
        %1294 = vmatprep.subr.mxu0 0.0
        %1295 = vmatpush1.msra.mxu0 0.0
        %1296 = vmatprep.subr.mxu0 0.0
        %1297 = vmatpush1.msra.mxu0 0.0
        %1298 = vmatprep.subr.mxu0 0.0
        %1299 = vmatpush1.msra.mxu0 0.0
        %1300 = vmatprep.subr.mxu0 0.0
        %1301 = vmatpush1.msra.mxu0 0.0
        %1302 = vmatprep.subr.mxu0 0.0
        %1303 = vmatpush1.msra.mxu0 0.0
        %1304 = vmatprep.subr.mxu0 0.0
        %1305 = vmatpush1.msra.mxu0 0.0
        %1306 = vmatprep.subr.mxu0 0.0
        %1307 = vmatpush1.msra.mxu0 0.0
        %1308 = vmatprep.subr.mxu0 0.0
        %1309 = vmatpush1.msra.mxu0 0.0
        %1310 = vmatprep.subr.mxu0 0.0
        %1311 = vmatpush1.msra.mxu0 0.0
        %1312 = vmatprep.subr.mxu0 0.0
        %1313 = vmatpush1.msra.mxu0 0.0
        %1314 = vmatprep.subr.mxu0 0.0
        %1315 = vmatpush1.msra.mxu0 0.0
        %1316 = vmatprep.subr.mxu0 0.0
        %1317 = vmatpush1.msra.mxu0 0.0
        %1318 = vmatprep.subr.mxu0 0.0
        %1319 = vmatpush1.msra.mxu0 0.0
        %1320 = vmatprep.subr.mxu0 0.0
        %1321 = vmatpush1.msra.mxu0 0.0
        %1322 = vmatprep.subr.mxu0 0.0
        %1323 = vmatpush1.msra.mxu0 0.0
        %1324 = vmatprep.subr.mxu0 0.0
        %1325 = vmatpush1.msra.mxu0 0.0
        %1326 = vmatprep.subr.mxu0 0.0
        %1327 = vmatpush1.msra.mxu0 0.0
        %1328 = vmatprep.subr.mxu0 0.0
        %1329 = vmatpush1.msra.mxu0 0.0
        %1330 = vmatprep.subr.mxu0 0.0
        %1331 = vmatpush1.msra.mxu0 0.0
        %1332 = vmatprep.subr.mxu0 0.0
        %1333 = vmatpush1.msra.mxu0 0.0
        %1334 = vmatprep.subr.mxu0 0.0
        %1335 = vmatpush1.msra.mxu0 0.0
        %1336 = vmatprep.subr.mxu0 0.0
        %1337 = vmatpush1.msra.mxu0 0.0
        %1338 = vmatprep.subr.mxu0 0.0
        %1339 = vmatpush1.msra.mxu0 0.0
        %1340 = vmatprep.subr.mxu0 0.0
        %1341 = vmatpush1.msra.mxu0 0.0
        %1342 = vmatprep.subr.mxu0 0.0
        %1343 = vmatpush1.msra.mxu0 0.0
        %1344 = vmatprep.mubr.f32.mxu0 0.0
        %1345 = vmatmul.mubr.f32.gmra.mrb[0].mxu0 %v559
        %v1346 = vpop.f32.mrb[0].mxu0
        %v1347 = vadd.f32 %v541, %v1346
        %v1348 = vpop.f32.mrb[0].mxu0
        %v1349 = vadd.f32 %v542, %v1348
        %1350 = vmatprep.mubr.f32.mxu0 0.0
        %1351 = vmatmul.mubr.f32.gmra.mrb[0].mxu0 %v562
        %v1352 = vpop.f32.mrb[0].mxu0
        %v1353 = vadd.f32 %v543, %v1352
        %v1354 = vpop.f32.mrb[0].mxu0
        %v1355 = vadd.f32 %v544, %v1354
        %1356 = vmatprep.mubr.f32.mxu0 0.0
        %1357 = vmatmul.mubr.f32.gmra.mrb[0].mxu0 %v565
        %v1358 = vpop.f32.mrb[0].mxu0
        %v1359 = vadd.f32 %v545, %v1358
        %v1360 = vpop.f32.mrb[0].mxu0
        %v1361 = vadd.f32 %v546, %v1360
        %1362 = vmatprep.mubr.f32.mxu0 0.0
        %1363 = vmatmul.mubr.f32.gmra.mrb[0].mxu0 %v568
        %v1364 = vpop.f32.mrb[0].mxu0
        %v1365 = vadd.f32 %v547, %v1364
        %v1366 = vpop.f32.mrb[0].mxu0
        %v1367 = vadd.f32 %v548, %v1366
        %1368 = vdwg.mxu0
        %s1369 = scalar_lea.vmem %s516, 96
        %v1370 = vld [vmem:[%s1369] sm:$0xff]
        %v1371 = vld [vmem:[%s1369 + $0x8] sm:$0xff]
        %v1372 = vld [vmem:[%s1369 + $0x10] sm:$0xff]
        %v1373 = vld [vmem:[%s1369 + $0x18] sm:$0xff]
        %1375 = vset.pattern.permute.xlu0 0
        %1376 = vperm.xlu0 %1375, %v1370
        %v1377 = vpop.permute.xlu0 %1376
        %1380 = vset.pattern.permute.xlu0 0
        %1381 = vperm.xlu0 %1380, %v1371
        %v1382 = vpop.permute.xlu0 %1381
        %1385 = vset.pattern.permute.xlu0 0
        %1386 = vperm.xlu0 %1385, %v1372
        %v1387 = vpop.permute.xlu0 %1386
        %1390 = vset.pattern.permute.xlu0 0
        %1391 = vperm.xlu0 %1390, %v1373
        %v1392 = vpop.permute.xlu0 %1391
        %v1394 = vadd.f32 %v1347, %v1377
        %v1395 = vadd.f32 %v1349, %v1377
        %v1396 = vadd.f32 %v1353, %v1382
        %v1397 = vadd.f32 %v1355, %v1382
        %v1398 = vadd.f32 %v1359, %v1387
        %v1399 = vadd.f32 %v1361, %v1387
        %v1400 = vadd.f32 %v1365, %v1392
        %v1401 = vadd.f32 %v1367, %v1392
        %v1402 = vmax.f32 %v1394, 0.0
        %v1403 = vmax.f32 %v1395, 0.0
        %v1404 = vmax.f32 %v1396, 0.0
        %v1405 = vmax.f32 %v1397, 0.0
        %v1406 = vmax.f32 %v1398, 0.0
        %v1407 = vmax.f32 %v1399, 0.0
        %v1408 = vmax.f32 %v1400, 0.0
        %v1409 = vmax.f32 %v1401, 0.0
        %s1410 = scalar_lea.vmem %s522, 12
        %v1411 = vld [vmem:[%s1410] sm:$0xf]
        %s1412 = scalar_lea.vmem %s528, 12
        %v1413 = vld [vmem:[%s1412] sm:$0xf]
        %1415 = vset.pattern.permute.xlu0 0
        %1416 = vperm.xlu0 %1415, %v1413
        %v1417 = vpop.permute.xlu0 %1416
        %v1420 = vsel %vm711, %v1411, 0
        %1422 = vmatprep.subr.mxu0 %v1403
        %1423 = vmatpush1.msra.mxu0 %v1402
        %1424 = vmatprep.subr.mxu0 %v1405
        %1425 = vmatpush1.msra.mxu0 %v1404
        %1426 = vmatprep.subr.mxu0 %v1407
        %1427 = vmatpush1.msra.mxu0 %v1406
        %1428 = vmatprep.subr.mxu0 %v1409
        %1429 = vmatpush1.msra.mxu0 %v1408
        %1430 = vmatprep.subr.mxu0 0.0
        %1431 = vmatpush1.msra.mxu0 0.0
        %1432 = vmatprep.subr.mxu0 0.0
        %1433 = vmatpush1.msra.mxu0 0.0
        %1434 = vmatprep.subr.mxu0 0.0
        %1435 = vmatpush1.msra.mxu0 0.0
        %1436 = vmatprep.subr.mxu0 0.0
        %1437 = vmatpush1.msra.mxu0 0.0
        %1438 = vmatprep.subr.mxu0 0.0
        %1439 = vmatpush1.msra.mxu0 0.0
        %1440 = vmatprep.subr.mxu0 0.0
        %1441 = vmatpush1.msra.mxu0 0.0
        %1442 = vmatprep.subr.mxu0 0.0
        %1443 = vmatpush1.msra.mxu0 0.0
        %1444 = vmatprep.subr.mxu0 0.0
        %1445 = vmatpush1.msra.mxu0 0.0
        %1446 = vmatprep.subr.mxu0 0.0
        %1447 = vmatpush1.msra.mxu0 0.0
        %1448 = vmatprep.subr.mxu0 0.0
        %1449 = vmatpush1.msra.mxu0 0.0
        %1450 = vmatprep.subr.mxu0 0.0
        %1451 = vmatpush1.msra.mxu0 0.0
        %1452 = vmatprep.subr.mxu0 0.0
        %1453 = vmatpush1.msra.mxu0 0.0
        %1454 = vmatprep.subr.mxu0 0.0
        %1455 = vmatpush1.msra.mxu0 0.0
        %1456 = vmatprep.subr.mxu0 0.0
        %1457 = vmatpush1.msra.mxu0 0.0
        %1458 = vmatprep.subr.mxu0 0.0
        %1459 = vmatpush1.msra.mxu0 0.0
        %1460 = vmatprep.subr.mxu0 0.0
        %1461 = vmatpush1.msra.mxu0 0.0
        %1462 = vmatprep.subr.mxu0 0.0
        %1463 = vmatpush1.msra.mxu0 0.0
        %1464 = vmatprep.subr.mxu0 0.0
        %1465 = vmatpush1.msra.mxu0 0.0
        %1466 = vmatprep.subr.mxu0 0.0
        %1467 = vmatpush1.msra.mxu0 0.0
        %1468 = vmatprep.subr.mxu0 0.0
        %1469 = vmatpush1.msra.mxu0 0.0
        %1470 = vmatprep.subr.mxu0 0.0
        %1471 = vmatpush1.msra.mxu0 0.0
        %1472 = vmatprep.subr.mxu0 0.0
        %1473 = vmatpush1.msra.mxu0 0.0
        %1474 = vmatprep.subr.mxu0 0.0
        %1475 = vmatpush1.msra.mxu0 0.0
        %1476 = vmatprep.subr.mxu0 0.0
        %1477 = vmatpush1.msra.mxu0 0.0
        %1478 = vmatprep.subr.mxu0 0.0
        %1479 = vmatpush1.msra.mxu0 0.0
        %1480 = vmatprep.subr.mxu0 0.0
        %1481 = vmatpush1.msra.mxu0 0.0
        %1482 = vmatprep.subr.mxu0 0.0
        %1483 = vmatpush1.msra.mxu0 0.0
        %1484 = vmatprep.subr.mxu0 0.0
        %1485 = vmatpush1.msra.mxu0 0.0
        %1486 = vmatprep.mubr.f32.mxu0 0.0
        %1487 = vmatmul.mubr.f32.gmra.mrb[0].mxu0 %v1420
        %v1488 = vpop.f32.mrb[0].mxu0
        %v1489 = vadd.f32 %v1417, %v1488
        %v1490 = vpop.f32.mrb[0].mxu0
        %v1491 = vadd.f32 %v1417, %v1490
        %1492 = vdwg.mxu0
        %s1493 = sld [smem:[#allocation3 + %s1273]]
        %p1494 = scmp.eq.s32.totalorder %s1273, 7
        %s1495 = sld [smem:[#allocation4 + %s1273]]
        %s1496 = scalar_select %p1494, 0.0, %s1495
        %v1497 = vstv %s1493
        %v1498 = vmul.f32 %v1497, %v1272
        %v1501 = vcombine.low %v1489, %v1491
        %v1503 = vadd.f32 %v1498, %v1501
        %s1504 = scalar_lea.vmem %s441, 24 [#allocation5]
        %v1505 = vld [vmem:[%s1504] sm:$0xff]
        %v1506 = vstv %s1496
        %v1507 = vmul.f32 %v1506, %v1505
        %v1508 = vadd.f32 %v1503, %v1507
        %s1509 = sadd.s32 %s554, 4
        %v1511 = vcombine.high %v1508, %v1508
        %v1512 = vsel %vm570, %v1508, 0
        %v1514 = vsel %vm570, %v1511, 0
        %1516 = vmatprep.subr.mxu0 %v1514
        %1517 = vmatpush1.msra.mxu0 %v1512
        %1518 = vmatprep.subr.mxu0 0.0
        %1519 = vmatpush1.msra.mxu0 0.0
        %1520 = vmatprep.subr.mxu0 0.0
        %1521 = vmatpush1.msra.mxu0 0.0
        %1522 = vmatprep.subr.mxu0 0.0
        %1523 = vmatpush1.msra.mxu0 0.0
        %1524 = vmatprep.subr.mxu0 0.0
        %1525 = vmatpush1.msra.mxu0 0.0
        %1526 = vmatprep.subr.mxu0 0.0
        %1527 = vmatpush1.msra.mxu0 0.0
        %1528 = vmatprep.subr.mxu0 0.0
        %1529 = vmatpush1.msra.mxu0 0.0
        %1530 = vmatprep.subr.mxu0 0.0
        %1531 = vmatpush1.msra.mxu0 0.0
        %1532 = vmatprep.subr.mxu0 0.0
        %1533 = vmatpush1.msra.mxu0 0.0
        %1534 = vmatprep.subr.mxu0 0.0
        %1535 = vmatpush1.msra.mxu0 0.0
        %1536 = vmatprep.subr.mxu0 0.0
        %1537 = vmatpush1.msra.mxu0 0.0
        %1538 = vmatprep.subr.mxu0 0.0
        %1539 = vmatpush1.msra.mxu0 0.0
        %1540 = vmatprep.subr.mxu0 0.0
        %1541 = vmatpush1.msra.mxu0 0.0
        %1542 = vmatprep.subr.mxu0 0.0
        %1543 = vmatpush1.msra.mxu0 0.0
        %1544 = vmatprep.subr.mxu0 0.0
        %1545 = vmatpush1.msra.mxu0 0.0
        %1546 = vmatprep.subr.mxu0 0.0
        %1547 = vmatpush1.msra.mxu0 0.0
        %1548 = vmatprep.subr.mxu0 0.0
        %1549 = vmatpush1.msra.mxu0 0.0
        %1550 = vmatprep.subr.mxu0 0.0
        %1551 = vmatpush1.msra.mxu0 0.0
        %1552 = vmatprep.subr.mxu0 0.0
        %1553 = vmatpush1.msra.mxu0 0.0
        %1554 = vmatprep.subr.mxu0 0.0
        %1555 = vmatpush1.msra.mxu0 0.0
        %1556 = vmatprep.subr.mxu0 0.0
        %1557 = vmatpush1.msra.mxu0 0.0
        %1558 = vmatprep.subr.mxu0 0.0
        %1559 = vmatpush1.msra.mxu0 0.0
        %1560 = vmatprep.subr.mxu0 0.0
        %1561 = vmatpush1.msra.mxu0 0.0
        %1562 = vmatprep.subr.mxu0 0.0
        %1563 = vmatpush1.msra.mxu0 0.0
        %1564 = vmatprep.subr.mxu0 0.0
        %1565 = vmatpush1.msra.mxu0 0.0
        %1566 = vmatprep.subr.mxu0 0.0
        %1567 = vmatpush1.msra.mxu0 0.0
        %1568 = vmatprep.subr.mxu0 0.0
        %1569 = vmatpush1.msra.mxu0 0.0
        %1570 = vmatprep.subr.mxu0 0.0
        %1571 = vmatpush1.msra.mxu0 0.0
        %1572 = vmatprep.subr.mxu0 0.0
        %1573 = vmatpush1.msra.mxu0 0.0
        %1574 = vmatprep.subr.mxu0 0.0
        %1575 = vmatpush1.msra.mxu0 0.0
        %1576 = vmatprep.subr.mxu0 0.0
        %1577 = vmatpush1.msra.mxu0 0.0
        %1578 = vmatprep.subr.mxu0 0.0
        %1579 = vmatpush1.msra.mxu0 0.0
        %1580 = vmatprep.mubr.f32.mxu0 0.0
        %1581 = vmatmul.mubr.f32.gmra.mrb[0].mxu0 %v559
        %v1582 = vpop.f32.mrb[0].mxu0
        %v1583 = vadd.f32 %v541, %v1582
        %v1584 = vpop.f32.mrb[0].mxu0
        %v1585 = vadd.f32 %v542, %v1584
        %1586 = vmatprep.mubr.f32.mxu0 0.0
        %1587 = vmatmul.mubr.f32.gmra.mrb[0].mxu0 %v562
        %v1588 = vpop.f32.mrb[0].mxu0
        %v1589 = vadd.f32 %v543, %v1588
        %v1590 = vpop.f32.mrb[0].mxu0
        %v1591 = vadd.f32 %v544, %v1590
        %1592 = vmatprep.mubr.f32.mxu0 0.0
        %1593 = vmatmul.mubr.f32.gmra.mrb[0].mxu0 %v565
        %v1594 = vpop.f32.mrb[0].mxu0
        %v1595 = vadd.f32 %v545, %v1594
        %v1596 = vpop.f32.mrb[0].mxu0
        %v1597 = vadd.f32 %v546, %v1596
        %1598 = vmatprep.mubr.f32.mxu0 0.0
        %1599 = vmatmul.mubr.f32.gmra.mrb[0].mxu0 %v568
        %v1600 = vpop.f32.mrb[0].mxu0
        %v1601 = vadd.f32 %v547, %v1600
        %v1602 = vpop.f32.mrb[0].mxu0
        %v1603 = vadd.f32 %v548, %v1602
        %1604 = vdwg.mxu0
        %s1605 = scalar_lea.vmem %s516, 128
        %v1606 = vld [vmem:[%s1605] sm:$0xff]
        %v1607 = vld [vmem:[%s1605 + $0x8] sm:$0xff]
        %v1608 = vld [vmem:[%s1605 + $0x10] sm:$0xff]
        %v1609 = vld [vmem:[%s1605 + $0x18] sm:$0xff]
        %1611 = vset.pattern.permute.xlu0 0
        %1612 = vperm.xlu0 %1611, %v1606
        %v1613 = vpop.permute.xlu0 %1612
        %1616 = vset.pattern.permute.xlu0 0
        %1617 = vperm.xlu0 %1616, %v1607
        %v1618 = vpop.permute.xlu0 %1617
        %1621 = vset.pattern.permute.xlu0 0
        %1622 = vperm.xlu0 %1621, %v1608
        %v1623 = vpop.permute.xlu0 %1622
        %1626 = vset.pattern.permute.xlu0 0
        %1627 = vperm.xlu0 %1626, %v1609
        %v1628 = vpop.permute.xlu0 %1627
        %v1630 = vadd.f32 %v1583, %v1613
        %v1631 = vadd.f32 %v1585, %v1613
        %v1632 = vadd.f32 %v1589, %v1618
        %v1633 = vadd.f32 %v1591, %v1618
        %v1634 = vadd.f32 %v1595, %v1623
        %v1635 = vadd.f32 %v1597, %v1623
        %v1636 = vadd.f32 %v1601, %v1628
        %v1637 = vadd.f32 %v1603, %v1628
        %v1638 = vmax.f32 %v1630, 0.0
        %v1639 = vmax.f32 %v1631, 0.0
        %v1640 = vmax.f32 %v1632, 0.0
        %v1641 = vmax.f32 %v1633, 0.0
        %v1642 = vmax.f32 %v1634, 0.0
        %v1643 = vmax.f32 %v1635, 0.0
        %v1644 = vmax.f32 %v1636, 0.0
        %v1645 = vmax.f32 %v1637, 0.0
        %s1646 = scalar_lea.vmem %s522, 16
        %v1647 = vld [vmem:[%s1646] sm:$0xf]
        %s1648 = scalar_lea.vmem %s528, 16
        %v1649 = vld [vmem:[%s1648] sm:$0xf]
        %1651 = vset.pattern.permute.xlu0 0
        %1652 = vperm.xlu0 %1651, %v1649
        %v1653 = vpop.permute.xlu0 %1652
        %v1656 = vsel %vm711, %v1647, 0
        %1658 = vmatprep.subr.mxu0 %v1639
        %1659 = vmatpush1.msra.mxu0 %v1638
        %1660 = vmatprep.subr.mxu0 %v1641
        %1661 = vmatpush1.msra.mxu0 %v1640
        %1662 = vmatprep.subr.mxu0 %v1643
        %1663 = vmatpush1.msra.mxu0 %v1642
        %1664 = vmatprep.subr.mxu0 %v1645
        %1665 = vmatpush1.msra.mxu0 %v1644
        %1666 = vmatprep.subr.mxu0 0.0
        %1667 = vmatpush1.msra.mxu0 0.0
        %1668 = vmatprep.subr.mxu0 0.0
        %1669 = vmatpush1.msra.mxu0 0.0
        %1670 = vmatprep.subr.mxu0 0.0
        %1671 = vmatpush1.msra.mxu0 0.0
        %1672 = vmatprep.subr.mxu0 0.0
        %1673 = vmatpush1.msra.mxu0 0.0
        %1674 = vmatprep.subr.mxu0 0.0
        %1675 = vmatpush1.msra.mxu0 0.0
        %1676 = vmatprep.subr.mxu0 0.0
        %1677 = vmatpush1.msra.mxu0 0.0
        %1678 = vmatprep.subr.mxu0 0.0
        %1679 = vmatpush1.msra.mxu0 0.0
        %1680 = vmatprep.subr.mxu0 0.0
        %1681 = vmatpush1.msra.mxu0 0.0
        %1682 = vmatprep.subr.mxu0 0.0
        %1683 = vmatpush1.msra.mxu0 0.0
        %1684 = vmatprep.subr.mxu0 0.0
        %1685 = vmatpush1.msra.mxu0 0.0
        %1686 = vmatprep.subr.mxu0 0.0
        %1687 = vmatpush1.msra.mxu0 0.0
        %1688 = vmatprep.subr.mxu0 0.0
        %1689 = vmatpush1.msra.mxu0 0.0
        %1690 = vmatprep.subr.mxu0 0.0
        %1691 = vmatpush1.msra.mxu0 0.0
        %1692 = vmatprep.subr.mxu0 0.0
        %1693 = vmatpush1.msra.mxu0 0.0
        %1694 = vmatprep.subr.mxu0 0.0
        %1695 = vmatpush1.msra.mxu0 0.0
        %1696 = vmatprep.subr.mxu0 0.0
        %1697 = vmatpush1.msra.mxu0 0.0
        %1698 = vmatprep.subr.mxu0 0.0
        %1699 = vmatpush1.msra.mxu0 0.0
        %1700 = vmatprep.subr.mxu0 0.0
        %1701 = vmatpush1.msra.mxu0 0.0
        %1702 = vmatprep.subr.mxu0 0.0
        %1703 = vmatpush1.msra.mxu0 0.0
        %1704 = vmatprep.subr.mxu0 0.0
        %1705 = vmatpush1.msra.mxu0 0.0
        %1706 = vmatprep.subr.mxu0 0.0
        %1707 = vmatpush1.msra.mxu0 0.0
        %1708 = vmatprep.subr.mxu0 0.0
        %1709 = vmatpush1.msra.mxu0 0.0
        %1710 = vmatprep.subr.mxu0 0.0
        %1711 = vmatpush1.msra.mxu0 0.0
        %1712 = vmatprep.subr.mxu0 0.0
        %1713 = vmatpush1.msra.mxu0 0.0
        %1714 = vmatprep.subr.mxu0 0.0
        %1715 = vmatpush1.msra.mxu0 0.0
        %1716 = vmatprep.subr.mxu0 0.0
        %1717 = vmatpush1.msra.mxu0 0.0
        %1718 = vmatprep.subr.mxu0 0.0
        %1719 = vmatpush1.msra.mxu0 0.0
        %1720 = vmatprep.subr.mxu0 0.0
        %1721 = vmatpush1.msra.mxu0 0.0
        %1722 = vmatprep.mubr.f32.mxu0 0.0
        %1723 = vmatmul.mubr.f32.gmra.mrb[0].mxu0 %v1656
        %v1724 = vpop.f32.mrb[0].mxu0
        %v1725 = vadd.f32 %v1653, %v1724
        %v1726 = vpop.f32.mrb[0].mxu0
        %v1727 = vadd.f32 %v1653, %v1726
        %1728 = vdwg.mxu0
        %s1729 = sld [smem:[#allocation3 + %s1509]]
        %p1730 = scmp.eq.s32.totalorder %s1509, 7
        %s1731 = sld [smem:[#allocation4 + %s1509]]
        %s1732 = scalar_select %p1730, 0.0, %s1731
        %v1733 = vstv %s1729
        %v1734 = vmul.f32 %v1733, %v1508
        %v1737 = vcombine.low %v1725, %v1727
        %v1739 = vadd.f32 %v1734, %v1737
        %s1740 = scalar_lea.vmem %s441, 32 [#allocation5]
        %v1741 = vld [vmem:[%s1740] sm:$0xff]
        %v1742 = vstv %s1732
        %v1743 = vmul.f32 %v1742, %v1741
        %v1744 = vadd.f32 %v1739, %v1743
        %s1745 = sadd.s32 %s554, 5
        %v1747 = vcombine.high %v1744, %v1744
        %v1748 = vsel %vm570, %v1744, 0
        %v1750 = vsel %vm570, %v1747, 0
        %1752 = vmatprep.subr.mxu0 %v1750
        %1753 = vmatpush1.msra.mxu0 %v1748
        %1754 = vmatprep.subr.mxu0 0.0
        %1755 = vmatpush1.msra.mxu0 0.0
        %1756 = vmatprep.subr.mxu0 0.0
        %1757 = vmatpush1.msra.mxu0 0.0
        %1758 = vmatprep.subr.mxu0 0.0
        %1759 = vmatpush1.msra.mxu0 0.0
        %1760 = vmatprep.subr.mxu0 0.0
        %1761 = vmatpush1.msra.mxu0 0.0
        %1762 = vmatprep.subr.mxu0 0.0
        %1763 = vmatpush1.msra.mxu0 0.0
        %1764 = vmatprep.subr.mxu0 0.0
        %1765 = vmatpush1.msra.mxu0 0.0
        %1766 = vmatprep.subr.mxu0 0.0
        %1767 = vmatpush1.msra.mxu0 0.0
        %1768 = vmatprep.subr.mxu0 0.0
        %1769 = vmatpush1.msra.mxu0 0.0
        %1770 = vmatprep.subr.mxu0 0.0
        %1771 = vmatpush1.msra.mxu0 0.0
        %1772 = vmatprep.subr.mxu0 0.0
        %1773 = vmatpush1.msra.mxu0 0.0
        %1774 = vmatprep.subr.mxu0 0.0
        %1775 = vmatpush1.msra.mxu0 0.0
        %1776 = vmatprep.subr.mxu0 0.0
        %1777 = vmatpush1.msra.mxu0 0.0
        %1778 = vmatprep.subr.mxu0 0.0
        %1779 = vmatpush1.msra.mxu0 0.0
        %1780 = vmatprep.subr.mxu0 0.0
        %1781 = vmatpush1.msra.mxu0 0.0
        %1782 = vmatprep.subr.mxu0 0.0
        %1783 = vmatpush1.msra.mxu0 0.0
        %1784 = vmatprep.subr.mxu0 0.0
        %1785 = vmatpush1.msra.mxu0 0.0
        %1786 = vmatprep.subr.mxu0 0.0
        %1787 = vmatpush1.msra.mxu0 0.0
        %1788 = vmatprep.subr.mxu0 0.0
        %1789 = vmatpush1.msra.mxu0 0.0
        %1790 = vmatprep.subr.mxu0 0.0
        %1791 = vmatpush1.msra.mxu0 0.0
        %1792 = vmatprep.subr.mxu0 0.0
        %1793 = vmatpush1.msra.mxu0 0.0
        %1794 = vmatprep.subr.mxu0 0.0
        %1795 = vmatpush1.msra.mxu0 0.0
        %1796 = vmatprep.subr.mxu0 0.0
        %1797 = vmatpush1.msra.mxu0 0.0
        %1798 = vmatprep.subr.mxu0 0.0
        %1799 = vmatpush1.msra.mxu0 0.0
        %1800 = vmatprep.subr.mxu0 0.0
        %1801 = vmatpush1.msra.mxu0 0.0
        %1802 = vmatprep.subr.mxu0 0.0
        %1803 = vmatpush1.msra.mxu0 0.0
        %1804 = vmatprep.subr.mxu0 0.0
        %1805 = vmatpush1.msra.mxu0 0.0
        %1806 = vmatprep.subr.mxu0 0.0
        %1807 = vmatpush1.msra.mxu0 0.0
        %1808 = vmatprep.subr.mxu0 0.0
        %1809 = vmatpush1.msra.mxu0 0.0
        %1810 = vmatprep.subr.mxu0 0.0
        %1811 = vmatpush1.msra.mxu0 0.0
        %1812 = vmatprep.subr.mxu0 0.0
        %1813 = vmatpush1.msra.mxu0 0.0
        %1814 = vmatprep.subr.mxu0 0.0
        %1815 = vmatpush1.msra.mxu0 0.0
        %1816 = vmatprep.mubr.f32.mxu0 0.0
        %1817 = vmatmul.mubr.f32.gmra.mrb[0].mxu0 %v559
        %v1818 = vpop.f32.mrb[0].mxu0
        %v1819 = vadd.f32 %v541, %v1818
        %v1820 = vpop.f32.mrb[0].mxu0
        %v1821 = vadd.f32 %v542, %v1820
        %1822 = vmatprep.mubr.f32.mxu0 0.0
        %1823 = vmatmul.mubr.f32.gmra.mrb[0].mxu0 %v562
        %v1824 = vpop.f32.mrb[0].mxu0
        %v1825 = vadd.f32 %v543, %v1824
        %v1826 = vpop.f32.mrb[0].mxu0
        %v1827 = vadd.f32 %v544, %v1826
        %1828 = vmatprep.mubr.f32.mxu0 0.0
        %1829 = vmatmul.mubr.f32.gmra.mrb[0].mxu0 %v565
        %v1830 = vpop.f32.mrb[0].mxu0
        %v1831 = vadd.f32 %v545, %v1830
        %v1832 = vpop.f32.mrb[0].mxu0
        %v1833 = vadd.f32 %v546, %v1832
        %1834 = vmatprep.mubr.f32.mxu0 0.0
        %1835 = vmatmul.mubr.f32.gmra.mrb[0].mxu0 %v568
        %v1836 = vpop.f32.mrb[0].mxu0
        %v1837 = vadd.f32 %v547, %v1836
        %v1838 = vpop.f32.mrb[0].mxu0
        %v1839 = vadd.f32 %v548, %v1838
        %1840 = vdwg.mxu0
        %s1841 = scalar_lea.vmem %s516, 160
        %v1842 = vld [vmem:[%s1841] sm:$0xff]
        %v1843 = vld [vmem:[%s1841 + $0x8] sm:$0xff]
        %v1844 = vld [vmem:[%s1841 + $0x10] sm:$0xff]
        %v1845 = vld [vmem:[%s1841 + $0x18] sm:$0xff]
        %1847 = vset.pattern.permute.xlu0 0
        %1848 = vperm.xlu0 %1847, %v1842
        %v1849 = vpop.permute.xlu0 %1848
        %1852 = vset.pattern.permute.xlu0 0
        %1853 = vperm.xlu0 %1852, %v1843
        %v1854 = vpop.permute.xlu0 %1853
        %1857 = vset.pattern.permute.xlu0 0
        %1858 = vperm.xlu0 %1857, %v1844
        %v1859 = vpop.permute.xlu0 %1858
        %1862 = vset.pattern.permute.xlu0 0
        %1863 = vperm.xlu0 %1862, %v1845
        %v1864 = vpop.permute.xlu0 %1863
        %v1866 = vadd.f32 %v1819, %v1849
        %v1867 = vadd.f32 %v1821, %v1849
        %v1868 = vadd.f32 %v1825, %v1854
        %v1869 = vadd.f32 %v1827, %v1854
        %v1870 = vadd.f32 %v1831, %v1859
        %v1871 = vadd.f32 %v1833, %v1859
        %v1872 = vadd.f32 %v1837, %v1864
        %v1873 = vadd.f32 %v1839, %v1864
        %v1874 = vmax.f32 %v1866, 0.0
        %v1875 = vmax.f32 %v1867, 0.0
        %v1876 = vmax.f32 %v1868, 0.0
        %v1877 = vmax.f32 %v1869, 0.0
        %v1878 = vmax.f32 %v1870, 0.0
        %v1879 = vmax.f32 %v1871, 0.0
        %v1880 = vmax.f32 %v1872, 0.0
        %v1881 = vmax.f32 %v1873, 0.0
        %s1882 = scalar_lea.vmem %s522, 20
        %v1883 = vld [vmem:[%s1882] sm:$0xf]
        %s1884 = scalar_lea.vmem %s528, 20
        %v1885 = vld [vmem:[%s1884] sm:$0xf]
        %1887 = vset.pattern.permute.xlu0 0
        %1888 = vperm.xlu0 %1887, %v1885
        %v1889 = vpop.permute.xlu0 %1888
        %v1892 = vsel %vm711, %v1883, 0
        %1894 = vmatprep.subr.mxu0 %v1875
        %1895 = vmatpush1.msra.mxu0 %v1874
        %1896 = vmatprep.subr.mxu0 %v1877
        %1897 = vmatpush1.msra.mxu0 %v1876
        %1898 = vmatprep.subr.mxu0 %v1879
        %1899 = vmatpush1.msra.mxu0 %v1878
        %1900 = vmatprep.subr.mxu0 %v1881
        %1901 = vmatpush1.msra.mxu0 %v1880
        %1902 = vmatprep.subr.mxu0 0.0
        %1903 = vmatpush1.msra.mxu0 0.0
        %1904 = vmatprep.subr.mxu0 0.0
        %1905 = vmatpush1.msra.mxu0 0.0
        %1906 = vmatprep.subr.mxu0 0.0
        %1907 = vmatpush1.msra.mxu0 0.0
        %1908 = vmatprep.subr.mxu0 0.0
        %1909 = vmatpush1.msra.mxu0 0.0
        %1910 = vmatprep.subr.mxu0 0.0
        %1911 = vmatpush1.msra.mxu0 0.0
        %1912 = vmatprep.subr.mxu0 0.0
        %1913 = vmatpush1.msra.mxu0 0.0
        %1914 = vmatprep.subr.mxu0 0.0
        %1915 = vmatpush1.msra.mxu0 0.0
        %1916 = vmatprep.subr.mxu0 0.0
        %1917 = vmatpush1.msra.mxu0 0.0
        %1918 = vmatprep.subr.mxu0 0.0
        %1919 = vmatpush1.msra.mxu0 0.0
        %1920 = vmatprep.subr.mxu0 0.0
        %1921 = vmatpush1.msra.mxu0 0.0
        %1922 = vmatprep.subr.mxu0 0.0
        %1923 = vmatpush1.msra.mxu0 0.0
        %1924 = vmatprep.subr.mxu0 0.0
        %1925 = vmatpush1.msra.mxu0 0.0
        %1926 = vmatprep.subr.mxu0 0.0
        %1927 = vmatpush1.msra.mxu0 0.0
        %1928 = vmatprep.subr.mxu0 0.0
        %1929 = vmatpush1.msra.mxu0 0.0
        %1930 = vmatprep.subr.mxu0 0.0
        %1931 = vmatpush1.msra.mxu0 0.0
        %1932 = vmatprep.subr.mxu0 0.0
        %1933 = vmatpush1.msra.mxu0 0.0
        %1934 = vmatprep.subr.mxu0 0.0
        %1935 = vmatpush1.msra.mxu0 0.0
        %1936 = vmatprep.subr.mxu0 0.0
        %1937 = vmatpush1.msra.mxu0 0.0
        %1938 = vmatprep.subr.mxu0 0.0
        %1939 = vmatpush1.msra.mxu0 0.0
        %1940 = vmatprep.subr.mxu0 0.0
        %1941 = vmatpush1.msra.mxu0 0.0
        %1942 = vmatprep.subr.mxu0 0.0
        %1943 = vmatpush1.msra.mxu0 0.0
        %1944 = vmatprep.subr.mxu0 0.0
        %1945 = vmatpush1.msra.mxu0 0.0
        %1946 = vmatprep.subr.mxu0 0.0
        %1947 = vmatpush1.msra.mxu0 0.0
        %1948 = vmatprep.subr.mxu0 0.0
        %1949 = vmatpush1.msra.mxu0 0.0
        %1950 = vmatprep.subr.mxu0 0.0
        %1951 = vmatpush1.msra.mxu0 0.0
        %1952 = vmatprep.subr.mxu0 0.0
        %1953 = vmatpush1.msra.mxu0 0.0
        %1954 = vmatprep.subr.mxu0 0.0
        %1955 = vmatpush1.msra.mxu0 0.0
        %1956 = vmatprep.subr.mxu0 0.0
        %1957 = vmatpush1.msra.mxu0 0.0
        %1958 = vmatprep.mubr.f32.mxu0 0.0
        %1959 = vmatmul.mubr.f32.gmra.mrb[0].mxu0 %v1892
        %v1960 = vpop.f32.mrb[0].mxu0
        %v1961 = vadd.f32 %v1889, %v1960
        %v1962 = vpop.f32.mrb[0].mxu0
        %v1963 = vadd.f32 %v1889, %v1962
        %1964 = vdwg.mxu0
        %s1965 = sld [smem:[#allocation3 + %s1745]]
        %p1966 = scmp.eq.s32.totalorder %s1745, 7
        %s1967 = sld [smem:[#allocation4 + %s1745]]
        %s1968 = scalar_select %p1966, 0.0, %s1967
        %v1969 = vstv %s1965
        %v1970 = vmul.f32 %v1969, %v1744
        %v1973 = vcombine.low %v1961, %v1963
        %v1975 = vadd.f32 %v1970, %v1973
        %s1976 = scalar_lea.vmem %s441, 40 [#allocation5]
        %v1977 = vld [vmem:[%s1976] sm:$0xff]
        %v1978 = vstv %s1968
        %v1979 = vmul.f32 %v1978, %v1977
        %v1980 = vadd.f32 %v1975, %v1979
        %s1981 = sadd.s32 %s554, 6
        %v1983 = vcombine.high %v1980, %v1980
        %v1984 = vsel %vm570, %v1980, 0
        %v1986 = vsel %vm570, %v1983, 0
        %1988 = vmatprep.subr.mxu0 %v1986
        %1989 = vmatpush1.msra.mxu0 %v1984
        %1990 = vmatprep.subr.mxu0 0.0
        %1991 = vmatpush1.msra.mxu0 0.0
        %1992 = vmatprep.subr.mxu0 0.0
        %1993 = vmatpush1.msra.mxu0 0.0
        %1994 = vmatprep.subr.mxu0 0.0
        %1995 = vmatpush1.msra.mxu0 0.0
        %1996 = vmatprep.subr.mxu0 0.0
        %1997 = vmatpush1.msra.mxu0 0.0
        %1998 = vmatprep.subr.mxu0 0.0
        %1999 = vmatpush1.msra.mxu0 0.0
        %2000 = vmatprep.subr.mxu0 0.0
        %2001 = vmatpush1.msra.mxu0 0.0
        %2002 = vmatprep.subr.mxu0 0.0
        %2003 = vmatpush1.msra.mxu0 0.0
        %2004 = vmatprep.subr.mxu0 0.0
        %2005 = vmatpush1.msra.mxu0 0.0
        %2006 = vmatprep.subr.mxu0 0.0
        %2007 = vmatpush1.msra.mxu0 0.0
        %2008 = vmatprep.subr.mxu0 0.0
        %2009 = vmatpush1.msra.mxu0 0.0
        %2010 = vmatprep.subr.mxu0 0.0
        %2011 = vmatpush1.msra.mxu0 0.0
        %2012 = vmatprep.subr.mxu0 0.0
        %2013 = vmatpush1.msra.mxu0 0.0
        %2014 = vmatprep.subr.mxu0 0.0
        %2015 = vmatpush1.msra.mxu0 0.0
        %2016 = vmatprep.subr.mxu0 0.0
        %2017 = vmatpush1.msra.mxu0 0.0
        %2018 = vmatprep.subr.mxu0 0.0
        %2019 = vmatpush1.msra.mxu0 0.0
        %2020 = vmatprep.subr.mxu0 0.0
        %2021 = vmatpush1.msra.mxu0 0.0
        %2022 = vmatprep.subr.mxu0 0.0
        %2023 = vmatpush1.msra.mxu0 0.0
        %2024 = vmatprep.subr.mxu0 0.0
        %2025 = vmatpush1.msra.mxu0 0.0
        %2026 = vmatprep.subr.mxu0 0.0
        %2027 = vmatpush1.msra.mxu0 0.0
        %2028 = vmatprep.subr.mxu0 0.0
        %2029 = vmatpush1.msra.mxu0 0.0
        %2030 = vmatprep.subr.mxu0 0.0
        %2031 = vmatpush1.msra.mxu0 0.0
        %2032 = vmatprep.subr.mxu0 0.0
        %2033 = vmatpush1.msra.mxu0 0.0
        %2034 = vmatprep.subr.mxu0 0.0
        %2035 = vmatpush1.msra.mxu0 0.0
        %2036 = vmatprep.subr.mxu0 0.0
        %2037 = vmatpush1.msra.mxu0 0.0
        %2038 = vmatprep.subr.mxu0 0.0
        %2039 = vmatpush1.msra.mxu0 0.0
        %2040 = vmatprep.subr.mxu0 0.0
        %2041 = vmatpush1.msra.mxu0 0.0
        %2042 = vmatprep.subr.mxu0 0.0
        %2043 = vmatpush1.msra.mxu0 0.0
        %2044 = vmatprep.subr.mxu0 0.0
        %2045 = vmatpush1.msra.mxu0 0.0
        %2046 = vmatprep.subr.mxu0 0.0
        %2047 = vmatpush1.msra.mxu0 0.0
        %2048 = vmatprep.subr.mxu0 0.0
        %2049 = vmatpush1.msra.mxu0 0.0
        %2050 = vmatprep.subr.mxu0 0.0
        %2051 = vmatpush1.msra.mxu0 0.0
        %2052 = vmatprep.mubr.f32.mxu0 0.0
        %2053 = vmatmul.mubr.f32.gmra.mrb[0].mxu0 %v559
        %v2054 = vpop.f32.mrb[0].mxu0
        %v2055 = vadd.f32 %v541, %v2054
        %v2056 = vpop.f32.mrb[0].mxu0
        %v2057 = vadd.f32 %v542, %v2056
        %2058 = vmatprep.mubr.f32.mxu0 0.0
        %2059 = vmatmul.mubr.f32.gmra.mrb[0].mxu0 %v562
        %v2060 = vpop.f32.mrb[0].mxu0
        %v2061 = vadd.f32 %v543, %v2060
        %v2062 = vpop.f32.mrb[0].mxu0
        %v2063 = vadd.f32 %v544, %v2062
        %2064 = vmatprep.mubr.f32.mxu0 0.0
        %2065 = vmatmul.mubr.f32.gmra.mrb[0].mxu0 %v565
        %v2066 = vpop.f32.mrb[0].mxu0
        %v2067 = vadd.f32 %v545, %v2066
        %v2068 = vpop.f32.mrb[0].mxu0
        %v2069 = vadd.f32 %v546, %v2068
        %2070 = vmatprep.mubr.f32.mxu0 0.0
        %2071 = vmatmul.mubr.f32.gmra.mrb[0].mxu0 %v568
        %v2072 = vpop.f32.mrb[0].mxu0
        %v2073 = vadd.f32 %v547, %v2072
        %v2074 = vpop.f32.mrb[0].mxu0
        %v2075 = vadd.f32 %v548, %v2074
        %2076 = vdwg.mxu0
        %s2077 = scalar_lea.vmem %s516, 192
        %v2078 = vld [vmem:[%s2077] sm:$0xff]
        %v2079 = vld [vmem:[%s2077 + $0x8] sm:$0xff]
        %v2080 = vld [vmem:[%s2077 + $0x10] sm:$0xff]
        %v2081 = vld [vmem:[%s2077 + $0x18] sm:$0xff]
        %2083 = vset.pattern.permute.xlu0 0
        %2084 = vperm.xlu0 %2083, %v2078
        %v2085 = vpop.permute.xlu0 %2084
        %2088 = vset.pattern.permute.xlu0 0
        %2089 = vperm.xlu0 %2088, %v2079
        %v2090 = vpop.permute.xlu0 %2089
        %2093 = vset.pattern.permute.xlu0 0
        %2094 = vperm.xlu0 %2093, %v2080
        %v2095 = vpop.permute.xlu0 %2094
        %2098 = vset.pattern.permute.xlu0 0
        %2099 = vperm.xlu0 %2098, %v2081
        %v2100 = vpop.permute.xlu0 %2099
        %v2102 = vadd.f32 %v2055, %v2085
        %v2103 = vadd.f32 %v2057, %v2085
        %v2104 = vadd.f32 %v2061, %v2090
        %v2105 = vadd.f32 %v2063, %v2090
        %v2106 = vadd.f32 %v2067, %v2095
        %v2107 = vadd.f32 %v2069, %v2095
        %v2108 = vadd.f32 %v2073, %v2100
        %v2109 = vadd.f32 %v2075, %v2100
        %v2110 = vmax.f32 %v2102, 0.0
        %v2111 = vmax.f32 %v2103, 0.0
        %v2112 = vmax.f32 %v2104, 0.0
        %v2113 = vmax.f32 %v2105, 0.0
        %v2114 = vmax.f32 %v2106, 0.0
        %v2115 = vmax.f32 %v2107, 0.0
        %v2116 = vmax.f32 %v2108, 0.0
        %v2117 = vmax.f32 %v2109, 0.0
        %s2118 = scalar_lea.vmem %s522, 24
        %v2119 = vld [vmem:[%s2118] sm:$0xf]
        %s2120 = scalar_lea.vmem %s528, 24
        %v2121 = vld [vmem:[%s2120] sm:$0xf]
        %2123 = vset.pattern.permute.xlu0 0
        %2124 = vperm.xlu0 %2123, %v2121
        %v2125 = vpop.permute.xlu0 %2124
        %v2128 = vsel %vm711, %v2119, 0
        %2130 = vmatprep.subr.mxu0 %v2111
        %2131 = vmatpush1.msra.mxu0 %v2110
        %2132 = vmatprep.subr.mxu0 %v2113
        %2133 = vmatpush1.msra.mxu0 %v2112
        %2134 = vmatprep.subr.mxu0 %v2115
        %2135 = vmatpush1.msra.mxu0 %v2114
        %2136 = vmatprep.subr.mxu0 %v2117
        %2137 = vmatpush1.msra.mxu0 %v2116
        %2138 = vmatprep.subr.mxu0 0.0
        %2139 = vmatpush1.msra.mxu0 0.0
        %2140 = vmatprep.subr.mxu0 0.0
        %2141 = vmatpush1.msra.mxu0 0.0
        %2142 = vmatprep.subr.mxu0 0.0
        %2143 = vmatpush1.msra.mxu0 0.0
        %2144 = vmatprep.subr.mxu0 0.0
        %2145 = vmatpush1.msra.mxu0 0.0
        %2146 = vmatprep.subr.mxu0 0.0
        %2147 = vmatpush1.msra.mxu0 0.0
        %2148 = vmatprep.subr.mxu0 0.0
        %2149 = vmatpush1.msra.mxu0 0.0
        %2150 = vmatprep.subr.mxu0 0.0
        %2151 = vmatpush1.msra.mxu0 0.0
        %2152 = vmatprep.subr.mxu0 0.0
        %2153 = vmatpush1.msra.mxu0 0.0
        %2154 = vmatprep.subr.mxu0 0.0
        %2155 = vmatpush1.msra.mxu0 0.0
        %2156 = vmatprep.subr.mxu0 0.0
        %2157 = vmatpush1.msra.mxu0 0.0
        %2158 = vmatprep.subr.mxu0 0.0
        %2159 = vmatpush1.msra.mxu0 0.0
        %2160 = vmatprep.subr.mxu0 0.0
        %2161 = vmatpush1.msra.mxu0 0.0
        %2162 = vmatprep.subr.mxu0 0.0
        %2163 = vmatpush1.msra.mxu0 0.0
        %2164 = vmatprep.subr.mxu0 0.0
        %2165 = vmatpush1.msra.mxu0 0.0
        %2166 = vmatprep.subr.mxu0 0.0
        %2167 = vmatpush1.msra.mxu0 0.0
        %2168 = vmatprep.subr.mxu0 0.0
        %2169 = vmatpush1.msra.mxu0 0.0
        %2170 = vmatprep.subr.mxu0 0.0
        %2171 = vmatpush1.msra.mxu0 0.0
        %2172 = vmatprep.subr.mxu0 0.0
        %2173 = vmatpush1.msra.mxu0 0.0
        %2174 = vmatprep.subr.mxu0 0.0
        %2175 = vmatpush1.msra.mxu0 0.0
        %2176 = vmatprep.subr.mxu0 0.0
        %2177 = vmatpush1.msra.mxu0 0.0
        %2178 = vmatprep.subr.mxu0 0.0
        %2179 = vmatpush1.msra.mxu0 0.0
        %2180 = vmatprep.subr.mxu0 0.0
        %2181 = vmatpush1.msra.mxu0 0.0
        %2182 = vmatprep.subr.mxu0 0.0
        %2183 = vmatpush1.msra.mxu0 0.0
        %2184 = vmatprep.subr.mxu0 0.0
        %2185 = vmatpush1.msra.mxu0 0.0
        %2186 = vmatprep.subr.mxu0 0.0
        %2187 = vmatpush1.msra.mxu0 0.0
        %2188 = vmatprep.subr.mxu0 0.0
        %2189 = vmatpush1.msra.mxu0 0.0
        %2190 = vmatprep.subr.mxu0 0.0
        %2191 = vmatpush1.msra.mxu0 0.0
        %2192 = vmatprep.subr.mxu0 0.0
        %2193 = vmatpush1.msra.mxu0 0.0
        %2194 = vmatprep.mubr.f32.mxu0 0.0
        %2195 = vmatmul.mubr.f32.gmra.mrb[0].mxu0 %v2128
        %v2196 = vpop.f32.mrb[0].mxu0
        %v2197 = vadd.f32 %v2125, %v2196
        %v2198 = vpop.f32.mrb[0].mxu0
        %v2199 = vadd.f32 %v2125, %v2198
        %2200 = vdwg.mxu0
        %s2201 = sld [smem:[#allocation3 + %s1981]]
        %p2202 = scmp.eq.s32.totalorder %s1981, 7
        %s2203 = sld [smem:[#allocation4 + %s1981]]
        %s2204 = scalar_select %p2202, 0.0, %s2203
        %v2205 = vstv %s2201
        %v2206 = vmul.f32 %v2205, %v1980
        %v2209 = vcombine.low %v2197, %v2199
        %v2211 = vadd.f32 %v2206, %v2209
        %s2212 = scalar_lea.vmem %s441, 48 [#allocation5]
        %v2213 = vld [vmem:[%s2212] sm:$0xff]
        %v2214 = vstv %s2204
        %v2215 = vmul.f32 %v2214, %v2213
        %v2216 = vadd.f32 %v2211, %v2215
        %s2217 = sadd.s32 %s554, 7
        %v2219 = vcombine.high %v2216, %v2216
        %v2220 = vsel %vm570, %v2216, 0
        %v2222 = vsel %vm570, %v2219, 0
        %2224 = vmatprep.subr.mxu0 %v2222
        %2225 = vmatpush1.msra.mxu0 %v2220
        %2226 = vmatprep.subr.mxu0 0.0
        %2227 = vmatpush1.msra.mxu0 0.0
        %2228 = vmatprep.subr.mxu0 0.0
        %2229 = vmatpush1.msra.mxu0 0.0
        %2230 = vmatprep.subr.mxu0 0.0
        %2231 = vmatpush1.msra.mxu0 0.0
        %2232 = vmatprep.subr.mxu0 0.0
        %2233 = vmatpush1.msra.mxu0 0.0
        %2234 = vmatprep.subr.mxu0 0.0
        %2235 = vmatpush1.msra.mxu0 0.0
        %2236 = vmatprep.subr.mxu0 0.0
        %2237 = vmatpush1.msra.mxu0 0.0
        %2238 = vmatprep.subr.mxu0 0.0
        %2239 = vmatpush1.msra.mxu0 0.0
        %2240 = vmatprep.subr.mxu0 0.0
        %2241 = vmatpush1.msra.mxu0 0.0
        %2242 = vmatprep.subr.mxu0 0.0
        %2243 = vmatpush1.msra.mxu0 0.0
        %2244 = vmatprep.subr.mxu0 0.0
        %2245 = vmatpush1.msra.mxu0 0.0
        %2246 = vmatprep.subr.mxu0 0.0
        %2247 = vmatpush1.msra.mxu0 0.0
        %2248 = vmatprep.subr.mxu0 0.0
        %2249 = vmatpush1.msra.mxu0 0.0
        %2250 = vmatprep.subr.mxu0 0.0
        %2251 = vmatpush1.msra.mxu0 0.0
        %2252 = vmatprep.subr.mxu0 0.0
        %2253 = vmatpush1.msra.mxu0 0.0
        %2254 = vmatprep.subr.mxu0 0.0
        %2255 = vmatpush1.msra.mxu0 0.0
        %2256 = vmatprep.subr.mxu0 0.0
        %2257 = vmatpush1.msra.mxu0 0.0
        %2258 = vmatprep.subr.mxu0 0.0
        %2259 = vmatpush1.msra.mxu0 0.0
        %2260 = vmatprep.subr.mxu0 0.0
        %2261 = vmatpush1.msra.mxu0 0.0
        %2262 = vmatprep.subr.mxu0 0.0
        %2263 = vmatpush1.msra.mxu0 0.0
        %2264 = vmatprep.subr.mxu0 0.0
        %2265 = vmatpush1.msra.mxu0 0.0
        %2266 = vmatprep.subr.mxu0 0.0
        %2267 = vmatpush1.msra.mxu0 0.0
        %2268 = vmatprep.subr.mxu0 0.0
        %2269 = vmatpush1.msra.mxu0 0.0
        %2270 = vmatprep.subr.mxu0 0.0
        %2271 = vmatpush1.msra.mxu0 0.0
        %2272 = vmatprep.subr.mxu0 0.0
        %2273 = vmatpush1.msra.mxu0 0.0
        %2274 = vmatprep.subr.mxu0 0.0
        %2275 = vmatpush1.msra.mxu0 0.0
        %2276 = vmatprep.subr.mxu0 0.0
        %2277 = vmatpush1.msra.mxu0 0.0
        %2278 = vmatprep.subr.mxu0 0.0
        %2279 = vmatpush1.msra.mxu0 0.0
        %2280 = vmatprep.subr.mxu0 0.0
        %2281 = vmatpush1.msra.mxu0 0.0
        %2282 = vmatprep.subr.mxu0 0.0
        %2283 = vmatpush1.msra.mxu0 0.0
        %2284 = vmatprep.subr.mxu0 0.0
        %2285 = vmatpush1.msra.mxu0 0.0
        %2286 = vmatprep.subr.mxu0 0.0
        %2287 = vmatpush1.msra.mxu0 0.0
        %2288 = vmatprep.mubr.f32.mxu0 0.0
        %2289 = vmatmul.mubr.f32.gmra.mrb[0].mxu0 %v559
        %v2290 = vpop.f32.mrb[0].mxu0
        %v2291 = vadd.f32 %v541, %v2290
        %v2292 = vpop.f32.mrb[0].mxu0
        %v2293 = vadd.f32 %v542, %v2292
        %2294 = vmatprep.mubr.f32.mxu0 0.0
        %2295 = vmatmul.mubr.f32.gmra.mrb[0].mxu0 %v562
        %v2296 = vpop.f32.mrb[0].mxu0
        %v2297 = vadd.f32 %v543, %v2296
        %v2298 = vpop.f32.mrb[0].mxu0
        %v2299 = vadd.f32 %v544, %v2298
        %2300 = vmatprep.mubr.f32.mxu0 0.0
        %2301 = vmatmul.mubr.f32.gmra.mrb[0].mxu0 %v565
        %v2302 = vpop.f32.mrb[0].mxu0
        %v2303 = vadd.f32 %v545, %v2302
        %v2304 = vpop.f32.mrb[0].mxu0
        %v2305 = vadd.f32 %v546, %v2304
        %2306 = vmatprep.mubr.f32.mxu0 0.0
        %2307 = vmatmul.mubr.f32.gmra.mrb[0].mxu0 %v568
        %v2308 = vpop.f32.mrb[0].mxu0
        %v2309 = vadd.f32 %v547, %v2308
        %v2310 = vpop.f32.mrb[0].mxu0
        %v2311 = vadd.f32 %v548, %v2310
        %2312 = vdwg.mxu0
        %s2313 = scalar_lea.vmem %s516, 224
        %v2314 = vld [vmem:[%s2313] sm:$0xff]
        %v2315 = vld [vmem:[%s2313 + $0x8] sm:$0xff]
        %v2316 = vld [vmem:[%s2313 + $0x10] sm:$0xff]
        %v2317 = vld [vmem:[%s2313 + $0x18] sm:$0xff]
        %2319 = vset.pattern.permute.xlu0 0
        %2320 = vperm.xlu0 %2319, %v2314
        %v2321 = vpop.permute.xlu0 %2320
        %2324 = vset.pattern.permute.xlu0 0
        %2325 = vperm.xlu0 %2324, %v2315
        %v2326 = vpop.permute.xlu0 %2325
        %2329 = vset.pattern.permute.xlu0 0
        %2330 = vperm.xlu0 %2329, %v2316
        %v2331 = vpop.permute.xlu0 %2330
        %2334 = vset.pattern.permute.xlu0 0
        %2335 = vperm.xlu0 %2334, %v2317
        %v2336 = vpop.permute.xlu0 %2335
        %v2338 = vadd.f32 %v2291, %v2321
        %v2339 = vadd.f32 %v2293, %v2321
        %v2340 = vadd.f32 %v2297, %v2326
        %v2341 = vadd.f32 %v2299, %v2326
        %v2342 = vadd.f32 %v2303, %v2331
        %v2343 = vadd.f32 %v2305, %v2331
        %v2344 = vadd.f32 %v2309, %v2336
        %v2345 = vadd.f32 %v2311, %v2336
        %v2346 = vmax.f32 %v2338, 0.0
        %v2347 = vmax.f32 %v2339, 0.0
        %v2348 = vmax.f32 %v2340, 0.0
        %v2349 = vmax.f32 %v2341, 0.0
        %v2350 = vmax.f32 %v2342, 0.0
        %v2351 = vmax.f32 %v2343, 0.0
        %v2352 = vmax.f32 %v2344, 0.0
        %v2353 = vmax.f32 %v2345, 0.0
        %s2354 = scalar_lea.vmem %s522, 28
        %v2355 = vld [vmem:[%s2354] sm:$0xf]
        %s2356 = scalar_lea.vmem %s528, 28
        %v2357 = vld [vmem:[%s2356] sm:$0xf]
        %2359 = vset.pattern.permute.xlu0 0
        %2360 = vperm.xlu0 %2359, %v2357
        %v2361 = vpop.permute.xlu0 %2360
        %v2364 = vsel %vm711, %v2355, 0
        %2366 = vmatprep.subr.mxu0 %v2347
        %2367 = vmatpush1.msra.mxu0 %v2346
        %2368 = vmatprep.subr.mxu0 %v2349
        %2369 = vmatpush1.msra.mxu0 %v2348
        %2370 = vmatprep.subr.mxu0 %v2351
        %2371 = vmatpush1.msra.mxu0 %v2350
        %2372 = vmatprep.subr.mxu0 %v2353
        %2373 = vmatpush1.msra.mxu0 %v2352
        %2374 = vmatprep.subr.mxu0 0.0
        %2375 = vmatpush1.msra.mxu0 0.0
        %2376 = vmatprep.subr.mxu0 0.0
        %2377 = vmatpush1.msra.mxu0 0.0
        %2378 = vmatprep.subr.mxu0 0.0
        %2379 = vmatpush1.msra.mxu0 0.0
        %2380 = vmatprep.subr.mxu0 0.0
        %2381 = vmatpush1.msra.mxu0 0.0
        %2382 = vmatprep.subr.mxu0 0.0
        %2383 = vmatpush1.msra.mxu0 0.0
        %2384 = vmatprep.subr.mxu0 0.0
        %2385 = vmatpush1.msra.mxu0 0.0
        %2386 = vmatprep.subr.mxu0 0.0
        %2387 = vmatpush1.msra.mxu0 0.0
        %2388 = vmatprep.subr.mxu0 0.0
        %2389 = vmatpush1.msra.mxu0 0.0
        %2390 = vmatprep.subr.mxu0 0.0
        %2391 = vmatpush1.msra.mxu0 0.0
        %2392 = vmatprep.subr.mxu0 0.0
        %2393 = vmatpush1.msra.mxu0 0.0
        %2394 = vmatprep.subr.mxu0 0.0
        %2395 = vmatpush1.msra.mxu0 0.0
        %2396 = vmatprep.subr.mxu0 0.0
        %2397 = vmatpush1.msra.mxu0 0.0
        %2398 = vmatprep.subr.mxu0 0.0
        %2399 = vmatpush1.msra.mxu0 0.0
        %2400 = vmatprep.subr.mxu0 0.0
        %2401 = vmatpush1.msra.mxu0 0.0
        %2402 = vmatprep.subr.mxu0 0.0
        %2403 = vmatpush1.msra.mxu0 0.0
        %2404 = vmatprep.subr.mxu0 0.0
        %2405 = vmatpush1.msra.mxu0 0.0
        %2406 = vmatprep.subr.mxu0 0.0
        %2407 = vmatpush1.msra.mxu0 0.0
        %2408 = vmatprep.subr.mxu0 0.0
        %2409 = vmatpush1.msra.mxu0 0.0
        %2410 = vmatprep.subr.mxu0 0.0
        %2411 = vmatpush1.msra.mxu0 0.0
        %2412 = vmatprep.subr.mxu0 0.0
        %2413 = vmatpush1.msra.mxu0 0.0
        %2414 = vmatprep.subr.mxu0 0.0
        %2415 = vmatpush1.msra.mxu0 0.0
        %2416 = vmatprep.subr.mxu0 0.0
        %2417 = vmatpush1.msra.mxu0 0.0
        %2418 = vmatprep.subr.mxu0 0.0
        %2419 = vmatpush1.msra.mxu0 0.0
        %2420 = vmatprep.subr.mxu0 0.0
        %2421 = vmatpush1.msra.mxu0 0.0
        %2422 = vmatprep.subr.mxu0 0.0
        %2423 = vmatpush1.msra.mxu0 0.0
        %2424 = vmatprep.subr.mxu0 0.0
        %2425 = vmatpush1.msra.mxu0 0.0
        %2426 = vmatprep.subr.mxu0 0.0
        %2427 = vmatpush1.msra.mxu0 0.0
        %2428 = vmatprep.subr.mxu0 0.0
        %2429 = vmatpush1.msra.mxu0 0.0
        %2430 = vmatprep.mubr.f32.mxu0 0.0
        %2431 = vmatmul.mubr.f32.gmra.mrb[0].mxu0 %v2364
        %v2432 = vpop.f32.mrb[0].mxu0
        %v2433 = vadd.f32 %v2361, %v2432
        %v2434 = vpop.f32.mrb[0].mxu0
        %v2435 = vadd.f32 %v2361, %v2434
        %2436 = vdwg.mxu0
        %s2437 = sld [smem:[#allocation3 + %s2217]]
        %p2438 = scmp.eq.s32.totalorder %s2217, 7
        %s2439 = sld [smem:[#allocation4 + %s2217]]
        %s2440 = scalar_select %p2438, 0.0, %s2439
        %v2441 = vstv %s2437
        %v2442 = vmul.f32 %v2441, %v2216
        %v2445 = vcombine.low %v2433, %v2435
        %v2447 = vadd.f32 %v2442, %v2445
        %s2448 = scalar_lea.vmem %s441, 56 [#allocation5]
        %v2449 = vld [vmem:[%s2448] sm:$0xff]
        %v2450 = vstv %s2440
        %v2451 = vmul.f32 %v2450, %v2449
        %v2452 = vadd.f32 %v2447, %v2451
        %2453 = vst [vmem:[%s501] sm:$0xff] %v2452
        %s2454 = sand.u32 %s232, 1
        %s2455 = scalar_lea.sflag [#allocation8], %s2454
        %s2456 = sand.u32 %s232, 1
        %s2457 = smul.addr %s2456, 8
        %s2458 = scalar_lea.vmem [#allocation7], %s2457
        // Predicated region
        $region129: #{tpu_custom_call.1} parent=115 // pred_check
          %p2459 = pneg %p242
        $region130: #{tpu_custom_call.1} parent=115 // pred_check_branch
          %2461 = sbr.rel (%p2459) target = $region132
        $region131: #{tpu_custom_call.1} parent=115 // pred_region
          %s2462 = smul.u32 2, %s37
          %s2464 = ssub.s32 128, 128
          %2465 = vsyncadd %s2455, %s2464
          %s2466 = smul.addr %s2462, 64
          %s2467 = scalar_lea.hbm %s9, %s2466
          %s2469 = sshll.u32 %s2458, 4
          %s2470 = int_to_ptr.vmem [resolvable:$true] %s2469
          %2472 = dma.vmem_to_hbm [thread:$0]  %s2470, 128, %s2467, %s2455
        $region132: #{tpu_custom_call.1} parent=115 // pred_fallthru
          _
      $region116: #{tpu_custom_call.1} parent=5 // pred_fallthru
        _
      %p2473 = scmp.le.s32.totalorder 2, %s28
      // Predicated region
      $region133: #{tpu_custom_call.1} parent=5 // pred_check
        %p2474 = pneg %p2473
      $region134: #{tpu_custom_call.1} parent=5 // pred_check_branch
        %2476 = sbr.rel (%p2474) target = $region136
      $region135: #{tpu_custom_call.1} parent=5 // pred_region
        %s2477 = ssub.s32 %s28, 2
        // Predicated region
        $region137: #{tpu_custom_call.1} parent=135 // pred_check
          %p2478 = pneg %p248
        $region138: #{tpu_custom_call.1} parent=135 // pred_check_branch
          %2480 = sbr.rel (%p2478) target = $region140
        $region139: #{tpu_custom_call.1} parent=135 // pred_region
          %s2481 = sand.u32 %s233, 1
          %s2482 = scalar_lea.sflag [#allocation8], %s2481
          %s2483 = sand.u32 %s233, 1
          %s2484 = smul.addr %s2483, 8
          %s2485 = scalar_lea.vmem [#allocation7], %s2484
          %2486 = dma.done %s2482, 128
        $region140: #{tpu_custom_call.1} parent=135 // pred_fallthru
          _
      $region136: #{tpu_custom_call.1} parent=5 // pred_fallthru
        _
    $region6: #{tpu_custom_call.1} parent=1 // loop_footer
      %s32 = sadd.s32 1, %s28
    $region7: #{tpu_custom_call.1} parent=1 // loop_footer_branch
      %27 = sbr.rel target = $region3
    $region8: #{tpu_custom_call.1} parent=1 // loop_exit
      _
    %2487 = vsyncpa [#allocation8], 1
    %s2488 = scalar_lea.sflag [#allocation8], 1
    %2489 = vsyncpa %s2488, 1

</llo_original>
